<compile_context>
chip_gen: v7x
topology: tpu7x:2x2x1
jax: 0.10.0
libtpu: 0.0.40
codegen_flags: <defaults>
</compile_context>

<pallas_src>
import functools

import numpy as np
import jax
import jax.numpy as jnp
from jax import lax
from jax.experimental import pallas as pl
from jax.experimental.pallas import tpu as pltpu

LRELU_SLOPE = 0.2

# Geometry (specialized to the synthetic config).
H0, W0 = 16, 16
WP0 = W0 + 2              # 18  (zero-padded width, scale 0)
N0 = 384                  # 18*18 = 324 padded up to 3*128 lanes
H1, W1 = 8, 8
WP1 = W1 + 2              # 10  (zero-padded width, scale 1)
N1 = 128                  # 10*10 = 100 padded up to 128 lanes
OUT_LANES = 128           # packed output: [0:64] scale-0 logits, [64:80] scale-1


# ----------------------------------------------------------------------------
# In-kernel helpers
# ----------------------------------------------------------------------------
def _shift_lanes(x, d):
    """y[:, p] = x[:, p + d] for valid p, zero-filled at the ends (static d)."""
    if d == 0:
        return x
    n = x.shape[1]
    fill = jnp.zeros((x.shape[0], abs(d)), x.dtype)
    if d > 0:
        return jnp.concatenate([x[:, d:], fill], axis=1)
    return jnp.concatenate([fill, x[:, :n + d]], axis=1)


def _scale_net(h, wp, interior_mask, zmap, w1, b1, w2, b2, whc):
    """One discriminator scale on a (C, N) flattened zero-padded grid.

    h             : (C, N) f32, zero outside the real padded grid.
    interior_mask : (1, N) 1.0 at interior (non-pad) grid positions.
    zmap          : (N, 128) selects stride-2 conv2 outputs and scatters them
                    into this scale's lanes of the packed output row.
    Returns (head contribution (1, 128), 3x3 window sums (C, N) for pooling).
    """
    # Conv2dBlock(C -> C1, 3x3, stride 1, pad 1) + LeakyReLU, K-folded (K=9*C).
    pieces = [_shift_lanes(h, (ki - 1) * wp + (kj - 1))
              for ki in range(3) for kj in range(3)]
    win_sum = pieces[0]
    for p in pieces[1:]:
        win_sum = win_sum + p                                   # 3x3 window sums
    a9 = jnp.concatenate(pieces, axis=0)                        # (9*C, N)
    a1 = jnp.dot(w1.astype(jnp.bfloat16), a9.astype(jnp.bfloat16),
                 preferred_element_type=jnp.float32)            # (C1, N)
    a1 = a1 + b1
    a1 = jnp.where(a1 > 0, a1, LRELU_SLOPE * a1)
    a1 = a1 * interior_mask          # zero the ring == conv2's zero padding

    # Conv2dBlock(C1 -> C2, 4x4, stride 2, pad 1) + LeakyReLU.
    # Computed corner-anchored dense, K-folded (K=16*C1=128); the stride-2
    # decimation happens in the zmap matmul below.
    pieces2 = [_shift_lanes(a1, ki * wp + kj)
               for ki in range(4) for kj in range(4)]
    a16 = jnp.concatenate(pieces2, axis=0)                      # (16*C1, N)
    a2 = jnp.dot(w2.astype(jnp.bfloat16), a16.astype(jnp.bfloat16),
                 preferred_element_type=jnp.float32)            # (C2, N)
    a2 = a2 + b2
    a2 = jnp.where(a2 > 0, a2, LRELU_SLOPE * a2)

    # Stride-2 select + scatter into packed output lanes (one matmul), then the
    # fused (1x1 -> 1x1) linear head as a cheap sublane reduction.
    a2_sel = jnp.dot(a2, zmap, preferred_element_type=jnp.float32)   # (C2, 128)
    head = jnp.sum(a2_sel * whc, axis=0, keepdims=True)              # (1, 128)
    return head, win_sum


def _council_kernel(h_ref, mask0_ref, spool_ref, zmap0_ref, mask1_ref,
                    zmap1_ref, bhl_ref,
                    w1a_ref, b1a_ref, w2a_ref, b2a_ref, wha_ref,
                    w1b_ref, b1b_ref, w2b_ref, b2b_ref, whb_ref,
                    out_ref):
    h0 = h_ref[0]                                               # (8, 384) f32

    # ---------------- scale 0 ----------------
    head0, win0 = _scale_net(h0, WP0, mask0_ref[...], zmap0_ref[...],
                             w1a_ref[...], b1a_ref[...],
                             w2a_ref[...], b2a_ref[...], wha_ref[...])

    # AvgPool2d(3, stride 2, pad 1, count_include_pad=False) of the concatenated
    # input + scatter onto scale-1's zero-padded 10x10 grid, fused into a single
    # matmul (stride-2 selection and 1/valid-count folded into Spool).
    h1 = jnp.dot(win0, spool_ref[...], preferred_element_type=jnp.float32)  # (8, 128)

    # ---------------- scale 1 ----------------
    head1, _ = _scale_net(h1, WP1, mask1_ref[...], zmap1_ref[...],
                          w1b_ref[...], b1b_ref[...],
                          w2b_ref[...], b2b_ref[...], whb_ref[...])

    # Lane-dense packed output: one full (1, 128) row per image.
    out_ref[0] = head0 + head1 + bhl_ref[...]


# ----------------------------------------------------------------------------
# Host-side constants (built once)
# ----------------------------------------------------------------------------
@functools.lru_cache(maxsize=None)
def _build_constants():
    # Scale-0 interior mask on the 18x18 (-> 384 lane) grid.
    mask0 = np.zeros((1, N0), np.float32)
    for r in range(1, H0 + 1):
        for c in range(1, W0 + 1):
            mask0[0, r * WP0 + c] = 1.0

    # Spool: avg-pool decimation + 1/count + scatter into scale-1's padded grid.
    # Zmap0: stride-2 conv2 corners -> packed output lanes [0, 64).
    spool = np.zeros((N0, N1), np.float32)
    zmap0 = np.zeros((N0, OUT_LANES), np.float32)
    for oh in range(H0 // 2):
        for ow in range(W0 // 2):
            rv = 2 if oh == 0 else 3          # valid rows of the 3x3 pool window
            cv = 2 if ow == 0 else 3          # valid cols (count_include_pad=False)
            q_center = (2 * oh + 1) * WP0 + (2 * ow + 1)
            spool[q_center, (oh + 1) * WP1 + (ow + 1)] = 1.0 / (rv * cv)
            zmap0[2 * oh * WP0 + 2 * ow, oh * (W0 // 2) + ow] = 1.0

    # Scale-1 interior mask on the 10x10 (-> 128 lane) grid.
    mask1 = np.zeros((1, N1), np.float32)
    for r in range(1, H1 + 1):
        for c in range(1, W1 + 1):
            mask1[0, r * WP1 + c] = 1.0

    # Zmap1: stride-2 conv2 corners (scale 1) -> packed output lanes [64, 80).
    zmap1 = np.zeros((N1, OUT_LANES), np.float32)
    for oh in range(H1 // 2):
        for ow in range(W1 // 2):
            zmap1[2 * oh * WP1 + 2 * ow, 64 + oh * (W1 // 2) + ow] = 1.0

    return (jnp.asarray(mask0), jnp.asarray(spool), jnp.asarray(zmap0),
            jnp.asarray(mask1), jnp.asarray(zmap1))


# ----------------------------------------------------------------------------
# Forward wrapper (single pallas_call for both scales)
# ----------------------------------------------------------------------------
def ms_image_dis_council_forward(x_nchw, x_input_nchw, params):
    """Returns list of per-scale discriminator outputs, NCHW (B, 1, h, w)."""
    B, cin, H, W = x_nchw.shape
    assert (H, W) == (H0, W0) and x_input_nchw.shape == x_nchw.shape
    C = 2 * cin
    assert C == 8, "kernel specialized to 2*input_dim == 8 channels"
    mask0, spool, zmap0, mask1, zmap1 = _build_constants()
    s0, s1 = params["s0"], params["s1"]

    # Only HBM-side glue: concat channels (NCHW-native), zero-pad, flatten to
    # the (C, lanes) padded-grid layout, pad lanes to a multiple of 128.
    h = jnp.concatenate([x_nchw, x_input_nchw], axis=1)            # (B, 8, 16, 16)
    h = jnp.pad(h, ((0, 0), (0, 0), (1, 1), (1, 1)))               # (B, 8, 18, 18)
    h = h.reshape(B, C, WP0 * (H0 + 2))                            # (B, 8, 324)
    h = jnp.pad(h, ((0, 0), (0, 0), (0, N0 - WP0 * (H0 + 2))))     # (B, 8, 384)

    def bspec(shape):
        return pl.BlockSpec(shape, lambda b, _n=len(shape): (0,) * _n)

    out = pl.pallas_call(
        _council_kernel,
        out_shape=jax.ShapeDtypeStruct((B, 1, OUT_LANES), jnp.float32),
        grid=(B,),
        in_specs=[
            pl.BlockSpec((1, C, N0), lambda b: (b, 0, 0)),
            bspec((1, N0)),                 # mask0
            bspec((N0, N1)),                # spool
            bspec((N0, OUT_LANES)),         # zmap0
            bspec((1, N1)),                 # mask1
            bspec((N1, OUT_LANES)),         # zmap1
            bspec((1, OUT_LANES)),          # bh_lanes
            bspec(s0["w1"].shape), bspec(s0["b1"].shape),
            bspec(s0["w2"].shape), bspec(s0["b2"].shape), bspec(s0["whc"].shape),
            bspec(s1["w1"].shape), bspec(s1["b1"].shape),
            bspec(s1["w2"].shape), bspec(s1["b2"].shape), bspec(s1["whc"].shape),
        ],
        out_specs=pl.BlockSpec((1, 1, OUT_LANES), lambda b: (b, 0, 0)),
        compiler_params=pltpu.CompilerParams(
            dimension_semantics=("parallel",)),
    )(h, mask0, spool, zmap0, mask1, zmap1, params["bh_lanes"],
      s0["w1"], s0["b1"], s0["w2"], s0["b2"], s0["whc"],
      s1["w1"], s1["b1"], s1["w2"], s1["b2"], s1["whc"])

    z0 = out[:, 0, :64].reshape(B, 1, H0 // 2, W0 // 2)
    z1 = out[:, 0, 64:80].reshape(B, 1, H1 // 2, W1 // 2)
    return [z0, z1]


# ----------------------------------------------------------------------------
# Parameters: PyTorch layout first, converted once to kernel layout
# ----------------------------------------------------------------------------
def make_torch_params(key, input_dim, dim, n_layer, num_scales,
                      dtype=jnp.float32):
    """Deterministic synthetic weights in PyTorch Conv2d layout (O, I, KH, KW)."""
    assert n_layer == 2, "fused kernel is specialized to n_layer=2"
    scales = []
    for _ in range(num_scales):
        cin, d = 2 * input_dim, dim
        key, k1, k2, k3, k4, k5, k6, k7, k8 = jax.random.split(key, 9)
        scales.append(dict(
            w1=0.1 * jax.random.normal(k1, (d, cin, 3, 3), dtype),
            b1=0.1 * jax.random.normal(k2, (d,), dtype),
            w2=0.1 * jax.random.normal(k3, (2 * d, d, 4, 4), dtype),
            b2=0.1 * jax.random.normal(k4, (2 * d,), dtype),
            w3=0.1 * jax.random.normal(k5, (2 * d, 2 * d, 1, 1), dtype),
            b3=0.1 * jax.random.normal(k6, (2 * d,), dtype),
            w4=0.1 * jax.random.normal(k7, (1, 2 * d, 1, 1), dtype),
            b4=0.1 * jax.random.normal(k8, (1,), dtype),
        ))
    return scales


def to_kernel_params(torch_scales):
    """One-time conversion: tap-major (Cout, taps*Cin) conv weights, column
    biases, fused 1x1->1x1 head (valid because norm='none', no activation
    between the two trailing convs), and the head bias pre-scattered into the
    packed output lanes."""
    assert len(torch_scales) == 2, "fused kernel is specialized to num_scales=2"
    ks = []
    for p in torch_scales:
        co1 = p["w1"].shape[0]
        co2 = p["w2"].shape[0]
        w1 = jnp.transpose(p["w1"], (0, 2, 3, 1)).reshape(co1, -1)   # (8, 72)
        w2 = jnp.transpose(p["w2"], (0, 2, 3, 1)).reshape(co2, -1)   # (16, 128)
        w3m = p["w3"][:, :, 0, 0]                                    # (16, 16)
        w4m = p["w4"][:, :, 0, 0]                                    # (1, 16)
        whc = (w4m @ w3m).reshape(-1, 1)                             # (16, 1)
        bh = (w4m @ p["b3"] + p["b4"])[0]                            # scalar
        ks.append(dict(w1=w1, b1=p["b1"].reshape(-1, 1),
                       w2=w2, b2=p["b2"].reshape(-1, 1),
                       whc=whc, bh=bh))
    bh_lanes = jnp.zeros((1, OUT_LANES), jnp.float32)
    bh_lanes = bh_lanes.at[0, 0:64].set(ks[0]["bh"])
    bh_lanes = bh_lanes.at[0, 64:80].set(ks[1]["bh"])
    return dict(s0={k: v for k, v in ks[0].items() if k != "bh"},
                s1={k: v for k, v in ks[1].items() if k != "bh"},
                bh_lanes=bh_lanes)


# ----------------------------------------------------------------------------
# Pure-JAX reference of the PyTorch module (for numerical validation)
# ----------------------------------------------------------------------------
def _ref_lrelu(x):
    return jnp.where(x > 0, x, LRELU_SLOPE * x)


def _ref_conv(x_nhwc, w_oihw, b, stride, pad):
    out = lax.conv_general_dilated(
        x_nhwc, jnp.transpose(w_oihw, (2, 3, 1, 0)),
        window_strides=(stride, stride),
        padding=((pad, pad), (pad, pad)),
        dimension_numbers=("NHWC", "HWIO", "NHWC"),
        precision=lax.Precision.HIGHEST)
    return out + b.reshape(1, 1, 1, -1)


def _ref_avgpool(x_nhwc):
    win, strd = (1, 3, 3, 1), (1, 2, 2, 1)
    pad = ((0, 0), (1, 1), (1, 1), (0, 0))
    s = lax.reduce_window(x_nhwc, 0.0, lax.add, win, strd, pad)
    c = lax.reduce_window(jnp.ones_like(x_nhwc[..., :1]), 0.0,
                          lax.add, win, strd, pad)
    return s / c


def reference_forward(x_nchw, x_input_nchw, torch_scales):
    x = jnp.transpose(x_nchw, (0, 2, 3, 1))
    xin = jnp.transpose(x_input_nchw, (0, 2, 3, 1))
    outs = []
    for s, p in enumerate(torch_scales):
        h = jnp.concatenate([x, xin], axis=-1)
        h = _ref_lrelu(_ref_conv(h, p["w1"], p["b1"], 1, 1))
        h = _ref_lrelu(_ref_conv(h, p["w2"], p["b2"], 2, 1))
        h = _ref_conv(h, p["w3"], p["b3"], 1, 0)
        h = _ref_conv(h, p["w4"], p["b4"], 1, 0)
        outs.append(jnp.transpose(h, (0, 3, 1, 2)))
        if s + 1 < len(torch_scales):
            x = _ref_avgpool(x)
            xin = _ref_avgpool(xin)
    return outs


# ----------------------------------------------------------------------------
if __name__ == "__main__":
    INPUT_DIM, DIM, N_LAYER, NUM_SCALES = 4, 8, 2, 2
    B = 2

    key = jax.random.PRNGKey(0)
    kx, kxi, kp = jax.random.split(key, 3)
    x = jax.random.normal(kx, (B, INPUT_DIM, H0, W0), jnp.float32)
    x_input = jax.random.normal(kxi, (B, INPUT_DIM, H0, W0), jnp.float32)

    torch_params = make_torch_params(kp, INPUT_DIM, DIM, N_LAYER, NUM_SCALES)
    kernel_params = to_kernel_params(torch_params)

    fwd = jax.jit(ms_image_dis_council_forward)
    outs = fwd(x, x_input, kernel_params)
    outs = [jax.block_until_ready(o) for o in outs]

    # shape / sanity checks (n_layer=2 -> one stride-2 stage per scale)
    assert outs[0].shape == (B, 1, H0 // 2, W0 // 2)
    assert outs[1].shape == (B, 1, H0 // 4, W0 // 4)
    assert all(bool(jnp.isfinite(o).all()) for o in outs)

    # numerical check against a pure-JAX reference of the PyTorch module
    refs = reference_forward(x, x_input, torch_params)
    for o, r in zip(outs, refs):
        err = float(jnp.max(jnp.abs(o - r)))
        assert err < 5e-2, f"mismatch vs reference: max abs err = {err}"

    print("KERNEL_OK")
</pallas_src>

<mosaic_0001>
module attributes {stable_mosaic.version = 11 : i64} {
  func.func @_council_kernel(%arg0: i32, %arg1: memref<1x8x384xf32, #tpu.memory_space<vmem>>, %arg2: memref<1x384xf32, #tpu.memory_space<vmem>>, %arg3: memref<384x128xf32, #tpu.memory_space<vmem>>, %arg4: memref<384x128xf32, #tpu.memory_space<vmem>>, %arg5: memref<1x128xf32, #tpu.memory_space<vmem>>, %arg6: memref<128x128xf32, #tpu.memory_space<vmem>>, %arg7: memref<1x128xf32, #tpu.memory_space<vmem>>, %arg8: memref<8x72xf32, #tpu.memory_space<vmem>>, %arg9: memref<8x1xf32, #tpu.memory_space<vmem>>, %arg10: memref<16x128xf32, #tpu.memory_space<vmem>>, %arg11: memref<16x1xf32, #tpu.memory_space<vmem>>, %arg12: memref<16x1xf32, #tpu.memory_space<vmem>>, %arg13: memref<8x72xf32, #tpu.memory_space<vmem>>, %arg14: memref<8x1xf32, #tpu.memory_space<vmem>>, %arg15: memref<16x128xf32, #tpu.memory_space<vmem>>, %arg16: memref<16x1xf32, #tpu.memory_space<vmem>>, %arg17: memref<16x1xf32, #tpu.memory_space<vmem>>, %arg18: memref<1x1x128xf32, #tpu.memory_space<vmem>>) attributes {dimension_semantics = [#tpu.dimension_semantics<parallel>], iteration_bounds = array<i64: 2>, scalar_prefetch = 0 : i64, scratch_operands = 0 : i64, tpu.core_type = #tpu.core_type<tc>, window_params = [{transform_indices = @transform_0, window_bounds = array<i64: 1, 8, 384>}, {pipeline_mode = #tpu.pipeline_mode<synchronous>, transform_indices = @transform_1, window_bounds = array<i64: 1, 384>}, {pipeline_mode = #tpu.pipeline_mode<synchronous>, transform_indices = @transform_2, window_bounds = array<i64: 384, 128>}, {pipeline_mode = #tpu.pipeline_mode<synchronous>, transform_indices = @transform_3, window_bounds = array<i64: 384, 128>}, {pipeline_mode = #tpu.pipeline_mode<synchronous>, transform_indices = @transform_4, window_bounds = array<i64: 1, 128>}, {pipeline_mode = #tpu.pipeline_mode<synchronous>, transform_indices = @transform_5, window_bounds = array<i64: 128, 128>}, {pipeline_mode = #tpu.pipeline_mode<synchronous>, transform_indices = @transform_6, window_bounds = array<i64: 1, 128>}, {pipeline_mode = #tpu.pipeline_mode<synchronous>, transform_indices = @transform_7, window_bounds = array<i64: 8, 72>}, {pipeline_mode = #tpu.pipeline_mode<synchronous>, transform_indices = @transform_8, window_bounds = array<i64: 8, 1>}, {pipeline_mode = #tpu.pipeline_mode<synchronous>, transform_indices = @transform_9, window_bounds = array<i64: 16, 128>}, {pipeline_mode = #tpu.pipeline_mode<synchronous>, transform_indices = @transform_10, window_bounds = array<i64: 16, 1>}, {pipeline_mode = #tpu.pipeline_mode<synchronous>, transform_indices = @transform_11, window_bounds = array<i64: 16, 1>}, {pipeline_mode = #tpu.pipeline_mode<synchronous>, transform_indices = @transform_12, window_bounds = array<i64: 8, 72>}, {pipeline_mode = #tpu.pipeline_mode<synchronous>, transform_indices = @transform_13, window_bounds = array<i64: 8, 1>}, {pipeline_mode = #tpu.pipeline_mode<synchronous>, transform_indices = @transform_14, window_bounds = array<i64: 16, 128>}, {pipeline_mode = #tpu.pipeline_mode<synchronous>, transform_indices = @transform_15, window_bounds = array<i64: 16, 1>}, {pipeline_mode = #tpu.pipeline_mode<synchronous>, transform_indices = @transform_16, window_bounds = array<i64: 16, 1>}, {transform_indices = @transform_17, window_bounds = array<i64: 1, 1, 128>}]} {
    %c0 = arith.constant 0 : index
    %c0_0 = arith.constant 0 : index
    %c0_1 = arith.constant 0 : index
    %0 = vector.load %arg1[%c0, %c0_0, %c0_1] : memref<1x8x384xf32, #tpu.memory_space<vmem>>, vector<1x8x384xf32>
    %1 = vector.shape_cast %0 : vector<1x8x384xf32> to vector<8x384xf32>
    %c0_2 = arith.constant 0 : index
    %c0_3 = arith.constant 0 : index
    %2 = vector.load %arg2[%c0_2, %c0_3] : memref<1x384xf32, #tpu.memory_space<vmem>>, vector<1x384xf32>
    %c0_4 = arith.constant 0 : index
    %c0_5 = arith.constant 0 : index
    %3 = vector.load %arg4[%c0_4, %c0_5] : memref<384x128xf32, #tpu.memory_space<vmem>>, vector<384x128xf32>
    %c0_6 = arith.constant 0 : index
    %c0_7 = arith.constant 0 : index
    %4 = vector.load %arg8[%c0_6, %c0_7] : memref<8x72xf32, #tpu.memory_space<vmem>>, vector<8x72xf32>
    %c0_8 = arith.constant 0 : index
    %c0_9 = arith.constant 0 : index
    %5 = vector.load %arg9[%c0_8, %c0_9] : memref<8x1xf32, #tpu.memory_space<vmem>>, vector<8x1xf32>
    %c0_10 = arith.constant 0 : index
    %c0_11 = arith.constant 0 : index
    %6 = vector.load %arg10[%c0_10, %c0_11] : memref<16x128xf32, #tpu.memory_space<vmem>>, vector<16x128xf32>
    %c0_12 = arith.constant 0 : index
    %c0_13 = arith.constant 0 : index
    %7 = vector.load %arg11[%c0_12, %c0_13] : memref<16x1xf32, #tpu.memory_space<vmem>>, vector<16x1xf32>
    %c0_14 = arith.constant 0 : index
    %c0_15 = arith.constant 0 : index
    %8 = vector.load %arg12[%c0_14, %c0_15] : memref<16x1xf32, #tpu.memory_space<vmem>>, vector<16x1xf32>
    %cst = arith.constant 0.000000e+00 : f32
    %9 = vector.broadcast %cst : f32 to vector<8x19xf32>
    %10 = vector.extract_strided_slice %1 {offsets = [0, 0], sizes = [8, 365], strides = [1, 1]} : vector<8x384xf32> to vector<8x365xf32>
    %11 = tpu.concatenate %9, %10 in 1 : vector<8x19xf32>, vector<8x365xf32> -> vector<8x384xf32>
    %cst_16 = arith.constant 0.000000e+00 : f32
    %12 = vector.broadcast %cst_16 : f32 to vector<8x18xf32>
    %13 = vector.extract_strided_slice %1 {offsets = [0, 0], sizes = [8, 366], strides = [1, 1]} : vector<8x384xf32> to vector<8x366xf32>
    %14 = tpu.concatenate %12, %13 in 1 : vector<8x18xf32>, vector<8x366xf32> -> vector<8x384xf32>
    %cst_17 = arith.constant 0.000000e+00 : f32
    %15 = vector.broadcast %cst_17 : f32 to vector<8x17xf32>
    %16 = vector.extract_strided_slice %1 {offsets = [0, 0], sizes = [8, 367], strides = [1, 1]} : vector<8x384xf32> to vector<8x367xf32>
    %17 = tpu.concatenate %15, %16 in 1 : vector<8x17xf32>, vector<8x367xf32> -> vector<8x384xf32>
    %cst_18 = arith.constant 0.000000e+00 : f32
    %18 = vector.broadcast %cst_18 : f32 to vector<8x1xf32>
    %19 = vector.extract_strided_slice %1 {offsets = [0, 0], sizes = [8, 383], strides = [1, 1]} : vector<8x384xf32> to vector<8x383xf32>
    %20 = tpu.concatenate %18, %19 in 1 : vector<8x1xf32>, vector<8x383xf32> -> vector<8x384xf32>
    %cst_19 = arith.constant 0.000000e+00 : f32
    %21 = vector.broadcast %cst_19 : f32 to vector<8x1xf32>
    %22 = vector.extract_strided_slice %1 {offsets = [0, 1], sizes = [8, 383], strides = [1, 1]} : vector<8x384xf32> to vector<8x383xf32>
    %23 = tpu.concatenate %22, %21 in 1 : vector<8x383xf32>, vector<8x1xf32> -> vector<8x384xf32>
    %cst_20 = arith.constant 0.000000e+00 : f32
    %24 = vector.broadcast %cst_20 : f32 to vector<8x17xf32>
    %25 = vector.extract_strided_slice %1 {offsets = [0, 17], sizes = [8, 367], strides = [1, 1]} : vector<8x384xf32> to vector<8x367xf32>
    %26 = tpu.concatenate %25, %24 in 1 : vector<8x367xf32>, vector<8x17xf32> -> vector<8x384xf32>
    %cst_21 = arith.constant 0.000000e+00 : f32
    %27 = vector.broadcast %cst_21 : f32 to vector<8x18xf32>
    %28 = vector.extract_strided_slice %1 {offsets = [0, 18], sizes = [8, 366], strides = [1, 1]} : vector<8x384xf32> to vector<8x366xf32>
    %29 = tpu.concatenate %28, %27 in 1 : vector<8x366xf32>, vector<8x18xf32> -> vector<8x384xf32>
    %cst_22 = arith.constant 0.000000e+00 : f32
    %30 = vector.broadcast %cst_22 : f32 to vector<8x19xf32>
    %31 = vector.extract_strided_slice %1 {offsets = [0, 19], sizes = [8, 365], strides = [1, 1]} : vector<8x384xf32> to vector<8x365xf32>
    %32 = tpu.concatenate %31, %30 in 1 : vector<8x365xf32>, vector<8x19xf32> -> vector<8x384xf32>
    %33 = arith.addf %11, %14 : vector<8x384xf32>
    %34 = arith.addf %33, %17 : vector<8x384xf32>
    %35 = arith.addf %34, %20 : vector<8x384xf32>
    %36 = arith.addf %35, %1 : vector<8x384xf32>
    %37 = arith.addf %36, %23 : vector<8x384xf32>
    %38 = arith.addf %37, %26 : vector<8x384xf32>
    %39 = arith.addf %38, %29 : vector<8x384xf32>
    %40 = arith.addf %39, %32 : vector<8x384xf32>
    %41 = tpu.concatenate %11, %14, %17, %20, %1, %23, %26, %29, %32 in 0 : vector<8x384xf32>, vector<8x384xf32>, vector<8x384xf32>, vector<8x384xf32>, vector<8x384xf32>, vector<8x384xf32>, vector<8x384xf32>, vector<8x384xf32>, vector<8x384xf32> -> vector<72x384xf32>
    %42 = arith.truncf %4 : vector<8x72xf32> to vector<8x72xbf16>
    %43 = arith.truncf %41 : vector<72x384xf32> to vector<72x384xbf16>
    %cst_23 = arith.constant dense<0.000000e+00> : vector<8x384xf32>
    %44 = tpu.matmul %42, %43, %cst_23 {dimension_numbers = #tpu.dot_dimension_numbers<[1], [0], [0], [1], [0, 0, 1, 1], [], []>} : vector<8x72xbf16>, vector<72x384xbf16>, vector<8x384xf32> -> vector<8x384xf32>
    %45 = vector.broadcast %5 : vector<8x1xf32> to vector<8x384xf32>
    %46 = arith.addf %44, %45 : vector<8x384xf32>
    %cst_24 = arith.constant 0.000000e+00 : f32
    %47 = vector.broadcast %cst_24 : f32 to vector<8x384xf32>
    %48 = arith.cmpf ogt, %46, %47 : vector<8x384xf32>
    %cst_25 = arith.constant 2.000000e-01 : f32
    %49 = vector.broadcast %cst_25 : f32 to vector<8x384xf32>
    %50 = arith.mulf %49, %46 : vector<8x384xf32>
    %51 = arith.select %48, %46, %50 : vector<8x384xi1>, vector<8x384xf32>
    %52 = vector.broadcast %2 : vector<1x384xf32> to vector<8x384xf32>
    %53 = arith.mulf %51, %52 : vector<8x384xf32>
    %cst_26 = arith.constant 0.000000e+00 : f32
    %54 = vector.broadcast %cst_26 : f32 to vector<8x1xf32>
    %55 = vector.extract_strided_slice %53 {offsets = [0, 1], sizes = [8, 383], strides = [1, 1]} : vector<8x384xf32> to vector<8x383xf32>
    %56 = tpu.concatenate %55, %54 in 1 : vector<8x383xf32>, vector<8x1xf32> -> vector<8x384xf32>
    %cst_27 = arith.constant 0.000000e+00 : f32
    %57 = vector.broadcast %cst_27 : f32 to vector<8x2xf32>
    %58 = vector.extract_strided_slice %53 {offsets = [0, 2], sizes = [8, 382], strides = [1, 1]} : vector<8x384xf32> to vector<8x382xf32>
    %59 = tpu.concatenate %58, %57 in 1 : vector<8x382xf32>, vector<8x2xf32> -> vector<8x384xf32>
    %cst_28 = arith.constant 0.000000e+00 : f32
    %60 = vector.broadcast %cst_28 : f32 to vector<8x3xf32>
    %61 = vector.extract_strided_slice %53 {offsets = [0, 3], sizes = [8, 381], strides = [1, 1]} : vector<8x384xf32> to vector<8x381xf32>
    %62 = tpu.concatenate %61, %60 in 1 : vector<8x381xf32>, vector<8x3xf32> -> vector<8x384xf32>
    %cst_29 = arith.constant 0.000000e+00 : f32
    %63 = vector.broadcast %cst_29 : f32 to vector<8x18xf32>
    %64 = vector.extract_strided_slice %53 {offsets = [0, 18], sizes = [8, 366], strides = [1, 1]} : vector<8x384xf32> to vector<8x366xf32>
    %65 = tpu.concatenate %64, %63 in 1 : vector<8x366xf32>, vector<8x18xf32> -> vector<8x384xf32>
    %cst_30 = arith.constant 0.000000e+00 : f32
    %66 = vector.broadcast %cst_30 : f32 to vector<8x19xf32>
    %67 = vector.extract_strided_slice %53 {offsets = [0, 19], sizes = [8, 365], strides = [1, 1]} : vector<8x384xf32> to vector<8x365xf32>
    %68 = tpu.concatenate %67, %66 in 1 : vector<8x365xf32>, vector<8x19xf32> -> vector<8x384xf32>
    %cst_31 = arith.constant 0.000000e+00 : f32
    %69 = vector.broadcast %cst_31 : f32 to vector<8x20xf32>
    %70 = vector.extract_strided_slice %53 {offsets = [0, 20], sizes = [8, 364], strides = [1, 1]} : vector<8x384xf32> to vector<8x364xf32>
    %71 = tpu.concatenate %70, %69 in 1 : vector<8x364xf32>, vector<8x20xf32> -> vector<8x384xf32>
    %cst_32 = arith.constant 0.000000e+00 : f32
    %72 = vector.broadcast %cst_32 : f32 to vector<8x21xf32>
    %73 = vector.extract_strided_slice %53 {offsets = [0, 21], sizes = [8, 363], strides = [1, 1]} : vector<8x384xf32> to vector<8x363xf32>
    %74 = tpu.concatenate %73, %72 in 1 : vector<8x363xf32>, vector<8x21xf32> -> vector<8x384xf32>
    %cst_33 = arith.constant 0.000000e+00 : f32
    %75 = vector.broadcast %cst_33 : f32 to vector<8x36xf32>
    %76 = vector.extract_strided_slice %53 {offsets = [0, 36], sizes = [8, 348], strides = [1, 1]} : vector<8x384xf32> to vector<8x348xf32>
    %77 = tpu.concatenate %76, %75 in 1 : vector<8x348xf32>, vector<8x36xf32> -> vector<8x384xf32>
    %cst_34 = arith.constant 0.000000e+00 : f32
    %78 = vector.broadcast %cst_34 : f32 to vector<8x37xf32>
    %79 = vector.extract_strided_slice %53 {offsets = [0, 37], sizes = [8, 347], strides = [1, 1]} : vector<8x384xf32> to vector<8x347xf32>
    %80 = tpu.concatenate %79, %78 in 1 : vector<8x347xf32>, vector<8x37xf32> -> vector<8x384xf32>
    %cst_35 = arith.constant 0.000000e+00 : f32
    %81 = vector.broadcast %cst_35 : f32 to vector<8x38xf32>
    %82 = vector.extract_strided_slice %53 {offsets = [0, 38], sizes = [8, 346], strides = [1, 1]} : vector<8x384xf32> to vector<8x346xf32>
    %83 = tpu.concatenate %82, %81 in 1 : vector<8x346xf32>, vector<8x38xf32> -> vector<8x384xf32>
    %cst_36 = arith.constant 0.000000e+00 : f32
    %84 = vector.broadcast %cst_36 : f32 to vector<8x39xf32>
    %85 = vector.extract_strided_slice %53 {offsets = [0, 39], sizes = [8, 345], strides = [1, 1]} : vector<8x384xf32> to vector<8x345xf32>
    %86 = tpu.concatenate %85, %84 in 1 : vector<8x345xf32>, vector<8x39xf32> -> vector<8x384xf32>
    %cst_37 = arith.constant 0.000000e+00 : f32
    %87 = vector.broadcast %cst_37 : f32 to vector<8x54xf32>
    %88 = vector.extract_strided_slice %53 {offsets = [0, 54], sizes = [8, 330], strides = [1, 1]} : vector<8x384xf32> to vector<8x330xf32>
    %89 = tpu.concatenate %88, %87 in 1 : vector<8x330xf32>, vector<8x54xf32> -> vector<8x384xf32>
    %cst_38 = arith.constant 0.000000e+00 : f32
    %90 = vector.broadcast %cst_38 : f32 to vector<8x55xf32>
    %91 = vector.extract_strided_slice %53 {offsets = [0, 55], sizes = [8, 329], strides = [1, 1]} : vector<8x384xf32> to vector<8x329xf32>
    %92 = tpu.concatenate %91, %90 in 1 : vector<8x329xf32>, vector<8x55xf32> -> vector<8x384xf32>
    %cst_39 = arith.constant 0.000000e+00 : f32
    %93 = vector.broadcast %cst_39 : f32 to vector<8x56xf32>
    %94 = vector.extract_strided_slice %53 {offsets = [0, 56], sizes = [8, 328], strides = [1, 1]} : vector<8x384xf32> to vector<8x328xf32>
    %95 = tpu.concatenate %94, %93 in 1 : vector<8x328xf32>, vector<8x56xf32> -> vector<8x384xf32>
    %cst_40 = arith.constant 0.000000e+00 : f32
    %96 = vector.broadcast %cst_40 : f32 to vector<8x57xf32>
    %97 = vector.extract_strided_slice %53 {offsets = [0, 57], sizes = [8, 327], strides = [1, 1]} : vector<8x384xf32> to vector<8x327xf32>
    %98 = tpu.concatenate %97, %96 in 1 : vector<8x327xf32>, vector<8x57xf32> -> vector<8x384xf32>
    %99 = tpu.concatenate %53, %56, %59, %62, %65, %68, %71, %74, %77, %80, %83, %86, %89, %92, %95, %98 in 0 : vector<8x384xf32>, vector<8x384xf32>, vector<8x384xf32>, vector<8x384xf32>, vector<8x384xf32>, vector<8x384xf32>, vector<8x384xf32>, vector<8x384xf32>, vector<8x384xf32>, vector<8x384xf32>, vector<8x384xf32>, vector<8x384xf32>, vector<8x384xf32>, vector<8x384xf32>, vector<8x384xf32>, vector<8x384xf32> -> vector<128x384xf32>
    %100 = arith.truncf %6 : vector<16x128xf32> to vector<16x128xbf16>
    %101 = arith.truncf %99 : vector<128x384xf32> to vector<128x384xbf16>
    %cst_41 = arith.constant dense<0.000000e+00> : vector<16x384xf32>
    %102 = tpu.matmul %100, %101, %cst_41 {dimension_numbers = #tpu.dot_dimension_numbers<[1], [0], [0], [1], [0, 0, 1, 1], [], []>} : vector<16x128xbf16>, vector<128x384xbf16>, vector<16x384xf32> -> vector<16x384xf32>
    %103 = vector.broadcast %7 : vector<16x1xf32> to vector<16x384xf32>
    %104 = arith.addf %102, %103 : vector<16x384xf32>
    %cst_42 = arith.constant 0.000000e+00 : f32
    %105 = vector.broadcast %cst_42 : f32 to vector<16x384xf32>
    %106 = arith.cmpf ogt, %104, %105 : vector<16x384xf32>
    %cst_43 = arith.constant 2.000000e-01 : f32
    %107 = vector.broadcast %cst_43 : f32 to vector<16x384xf32>
    %108 = arith.mulf %107, %104 : vector<16x384xf32>
    %109 = arith.select %106, %104, %108 : vector<16x384xi1>, vector<16x384xf32>
    %cst_44 = arith.constant dense<0.000000e+00> : vector<16x128xf32>
    %110 = tpu.matmul %109, %3, %cst_44 {dimension_numbers = #tpu.dot_dimension_numbers<[1], [0], [0], [1], [0, 0, 1, 1], [], []>} : vector<16x384xf32>, vector<384x128xf32>, vector<16x128xf32> -> vector<16x128xf32>
    %111 = vector.broadcast %8 : vector<16x1xf32> to vector<16x128xf32>
    %112 = arith.mulf %110, %111 : vector<16x128xf32>
    %cst_45 = arith.constant dense<0.000000e+00> : vector<128xf32>
    %113 = vector.multi_reduction <add>, %112, %cst_45 [0] : vector<16x128xf32> to vector<128xf32>
    %114 = vector.shape_cast %113 : vector<128xf32> to vector<1x128xf32>
    %c0_46 = arith.constant 0 : index
    %c0_47 = arith.constant 0 : index
    %115 = vector.load %arg3[%c0_46, %c0_47] : memref<384x128xf32, #tpu.memory_space<vmem>>, vector<384x128xf32>
    %cst_48 = arith.constant dense<0.000000e+00> : vector<8x128xf32>
    %116 = tpu.matmul %40, %115, %cst_48 {dimension_numbers = #tpu.dot_dimension_numbers<[1], [0], [0], [1], [0, 0, 1, 1], [], []>} : vector<8x384xf32>, vector<384x128xf32>, vector<8x128xf32> -> vector<8x128xf32>
    %c0_49 = arith.constant 0 : index
    %c0_50 = arith.constant 0 : index
    %117 = vector.load %arg5[%c0_49, %c0_50] : memref<1x128xf32, #tpu.memory_space<vmem>>, vector<1x128xf32>
    %c0_51 = arith.constant 0 : index
    %c0_52 = arith.constant 0 : index
    %118 = vector.load %arg6[%c0_51, %c0_52] : memref<128x128xf32, #tpu.memory_space<vmem>>, vector<128x128xf32>
    %c0_53 = arith.constant 0 : index
    %c0_54 = arith.constant 0 : index
    %119 = vector.load %arg13[%c0_53, %c0_54] : memref<8x72xf32, #tpu.memory_space<vmem>>, vector<8x72xf32>
    %c0_55 = arith.constant 0 : index
    %c0_56 = arith.constant 0 : index
    %120 = vector.load %arg14[%c0_55, %c0_56] : memref<8x1xf32, #tpu.memory_space<vmem>>, vector<8x1xf32>
    %c0_57 = arith.constant 0 : index
    %c0_58 = arith.constant 0 : index
    %121 = vector.load %arg15[%c0_57, %c0_58] : memref<16x128xf32, #tpu.memory_space<vmem>>, vector<16x128xf32>
    %c0_59 = arith.constant 0 : index
    %c0_60 = arith.constant 0 : index
    %122 = vector.load %arg16[%c0_59, %c0_60] : memref<16x1xf32, #tpu.memory_space<vmem>>, vector<16x1xf32>
    %c0_61 = arith.constant 0 : index
    %c0_62 = arith.constant 0 : index
    %123 = vector.load %arg17[%c0_61, %c0_62] : memref<16x1xf32, #tpu.memory_space<vmem>>, vector<16x1xf32>
    %cst_63 = arith.constant 0.000000e+00 : f32
    %124 = vector.broadcast %cst_63 : f32 to vector<8x11xf32>
    %125 = vector.extract_strided_slice %116 {offsets = [0, 0], sizes = [8, 117], strides = [1, 1]} : vector<8x128xf32> to vector<8x117xf32>
    %126 = tpu.concatenate %124, %125 in 1 : vector<8x11xf32>, vector<8x117xf32> -> vector<8x128xf32>
    %cst_64 = arith.constant 0.000000e+00 : f32
    %127 = vector.broadcast %cst_64 : f32 to vector<8x10xf32>
    %128 = vector.extract_strided_slice %116 {offsets = [0, 0], sizes = [8, 118], strides = [1, 1]} : vector<8x128xf32> to vector<8x118xf32>
    %129 = tpu.concatenate %127, %128 in 1 : vector<8x10xf32>, vector<8x118xf32> -> vector<8x128xf32>
    %cst_65 = arith.constant 0.000000e+00 : f32
    %130 = vector.broadcast %cst_65 : f32 to vector<8x9xf32>
    %131 = vector.extract_strided_slice %116 {offsets = [0, 0], sizes = [8, 119], strides = [1, 1]} : vector<8x128xf32> to vector<8x119xf32>
    %132 = tpu.concatenate %130, %131 in 1 : vector<8x9xf32>, vector<8x119xf32> -> vector<8x128xf32>
    %cst_66 = arith.constant 0.000000e+00 : f32
    %133 = vector.broadcast %cst_66 : f32 to vector<8x1xf32>
    %134 = vector.extract_strided_slice %116 {offsets = [0, 0], sizes = [8, 127], strides = [1, 1]} : vector<8x128xf32> to vector<8x127xf32>
    %135 = tpu.concatenate %133, %134 in 1 : vector<8x1xf32>, vector<8x127xf32> -> vector<8x128xf32>
    %cst_67 = arith.constant 0.000000e+00 : f32
    %136 = vector.broadcast %cst_67 : f32 to vector<8x1xf32>
    %137 = vector.extract_strided_slice %116 {offsets = [0, 1], sizes = [8, 127], strides = [1, 1]} : vector<8x128xf32> to vector<8x127xf32>
    %138 = tpu.concatenate %137, %136 in 1 : vector<8x127xf32>, vector<8x1xf32> -> vector<8x128xf32>
    %cst_68 = arith.constant 0.000000e+00 : f32
    %139 = vector.broadcast %cst_68 : f32 to vector<8x9xf32>
    %140 = vector.extract_strided_slice %116 {offsets = [0, 9], sizes = [8, 119], strides = [1, 1]} : vector<8x128xf32> to vector<8x119xf32>
    %141 = tpu.concatenate %140, %139 in 1 : vector<8x119xf32>, vector<8x9xf32> -> vector<8x128xf32>
    %cst_69 = arith.constant 0.000000e+00 : f32
    %142 = vector.broadcast %cst_69 : f32 to vector<8x10xf32>
    %143 = vector.extract_strided_slice %116 {offsets = [0, 10], sizes = [8, 118], strides = [1, 1]} : vector<8x128xf32> to vector<8x118xf32>
    %144 = tpu.concatenate %143, %142 in 1 : vector<8x118xf32>, vector<8x10xf32> -> vector<8x128xf32>
    %cst_70 = arith.constant 0.000000e+00 : f32
    %145 = vector.broadcast %cst_70 : f32 to vector<8x11xf32>
    %146 = vector.extract_strided_slice %116 {offsets = [0, 11], sizes = [8, 117], strides = [1, 1]} : vector<8x128xf32> to vector<8x117xf32>
    %147 = tpu.concatenate %146, %145 in 1 : vector<8x117xf32>, vector<8x11xf32> -> vector<8x128xf32>
    %148 = tpu.concatenate %126, %129, %132, %135, %116, %138, %141, %144, %147 in 0 : vector<8x128xf32>, vector<8x128xf32>, vector<8x128xf32>, vector<8x128xf32>, vector<8x128xf32>, vector<8x128xf32>, vector<8x128xf32>, vector<8x128xf32>, vector<8x128xf32> -> vector<72x128xf32>
    %149 = arith.truncf %119 : vector<8x72xf32> to vector<8x72xbf16>
    %150 = arith.truncf %148 : vector<72x128xf32> to vector<72x128xbf16>
    %cst_71 = arith.constant dense<0.000000e+00> : vector<8x128xf32>
    %151 = tpu.matmul %149, %150, %cst_71 {dimension_numbers = #tpu.dot_dimension_numbers<[1], [0], [0], [1], [0, 0, 1, 1], [], []>} : vector<8x72xbf16>, vector<72x128xbf16>, vector<8x128xf32> -> vector<8x128xf32>
    %152 = vector.broadcast %120 : vector<8x1xf32> to vector<8x128xf32>
    %153 = arith.addf %151, %152 : vector<8x128xf32>
    %cst_72 = arith.constant 0.000000e+00 : f32
    %154 = vector.broadcast %cst_72 : f32 to vector<8x128xf32>
    %155 = arith.cmpf ogt, %153, %154 : vector<8x128xf32>
    %cst_73 = arith.constant 2.000000e-01 : f32
    %156 = vector.broadcast %cst_73 : f32 to vector<8x128xf32>
    %157 = arith.mulf %156, %153 : vector<8x128xf32>
    %158 = arith.select %155, %153, %157 : vector<8x128xi1>, vector<8x128xf32>
    %159 = vector.broadcast %117 : vector<1x128xf32> to vector<8x128xf32>
    %160 = arith.mulf %158, %159 : vector<8x128xf32>
    %cst_74 = arith.constant 0.000000e+00 : f32
    %161 = vector.broadcast %cst_74 : f32 to vector<8x1xf32>
    %162 = vector.extract_strided_slice %160 {offsets = [0, 1], sizes = [8, 127], strides = [1, 1]} : vector<8x128xf32> to vector<8x127xf32>
    %163 = tpu.concatenate %162, %161 in 1 : vector<8x127xf32>, vector<8x1xf32> -> vector<8x128xf32>
    %cst_75 = arith.constant 0.000000e+00 : f32
    %164 = vector.broadcast %cst_75 : f32 to vector<8x2xf32>
    %165 = vector.extract_strided_slice %160 {offsets = [0, 2], sizes = [8, 126], strides = [1, 1]} : vector<8x128xf32> to vector<8x126xf32>
    %166 = tpu.concatenate %165, %164 in 1 : vector<8x126xf32>, vector<8x2xf32> -> vector<8x128xf32>
    %cst_76 = arith.constant 0.000000e+00 : f32
    %167 = vector.broadcast %cst_76 : f32 to vector<8x3xf32>
    %168 = vector.extract_strided_slice %160 {offsets = [0, 3], sizes = [8, 125], strides = [1, 1]} : vector<8x128xf32> to vector<8x125xf32>
    %169 = tpu.concatenate %168, %167 in 1 : vector<8x125xf32>, vector<8x3xf32> -> vector<8x128xf32>
    %cst_77 = arith.constant 0.000000e+00 : f32
    %170 = vector.broadcast %cst_77 : f32 to vector<8x10xf32>
    %171 = vector.extract_strided_slice %160 {offsets = [0, 10], sizes = [8, 118], strides = [1, 1]} : vector<8x128xf32> to vector<8x118xf32>
    %172 = tpu.concatenate %171, %170 in 1 : vector<8x118xf32>, vector<8x10xf32> -> vector<8x128xf32>
    %cst_78 = arith.constant 0.000000e+00 : f32
    %173 = vector.broadcast %cst_78 : f32 to vector<8x11xf32>
    %174 = vector.extract_strided_slice %160 {offsets = [0, 11], sizes = [8, 117], strides = [1, 1]} : vector<8x128xf32> to vector<8x117xf32>
    %175 = tpu.concatenate %174, %173 in 1 : vector<8x117xf32>, vector<8x11xf32> -> vector<8x128xf32>
    %cst_79 = arith.constant 0.000000e+00 : f32
    %176 = vector.broadcast %cst_79 : f32 to vector<8x12xf32>
    %177 = vector.extract_strided_slice %160 {offsets = [0, 12], sizes = [8, 116], strides = [1, 1]} : vector<8x128xf32> to vector<8x116xf32>
    %178 = tpu.concatenate %177, %176 in 1 : vector<8x116xf32>, vector<8x12xf32> -> vector<8x128xf32>
    %cst_80 = arith.constant 0.000000e+00 : f32
    %179 = vector.broadcast %cst_80 : f32 to vector<8x13xf32>
    %180 = vector.extract_strided_slice %160 {offsets = [0, 13], sizes = [8, 115], strides = [1, 1]} : vector<8x128xf32> to vector<8x115xf32>
    %181 = tpu.concatenate %180, %179 in 1 : vector<8x115xf32>, vector<8x13xf32> -> vector<8x128xf32>
    %cst_81 = arith.constant 0.000000e+00 : f32
    %182 = vector.broadcast %cst_81 : f32 to vector<8x20xf32>
    %183 = vector.extract_strided_slice %160 {offsets = [0, 20], sizes = [8, 108], strides = [1, 1]} : vector<8x128xf32> to vector<8x108xf32>
    %184 = tpu.concatenate %183, %182 in 1 : vector<8x108xf32>, vector<8x20xf32> -> vector<8x128xf32>
    %cst_82 = arith.constant 0.000000e+00 : f32
    %185 = vector.broadcast %cst_82 : f32 to vector<8x21xf32>
    %186 = vector.extract_strided_slice %160 {offsets = [0, 21], sizes = [8, 107], strides = [1, 1]} : vector<8x128xf32> to vector<8x107xf32>
    %187 = tpu.concatenate %186, %185 in 1 : vector<8x107xf32>, vector<8x21xf32> -> vector<8x128xf32>
    %cst_83 = arith.constant 0.000000e+00 : f32
    %188 = vector.broadcast %cst_83 : f32 to vector<8x22xf32>
    %189 = vector.extract_strided_slice %160 {offsets = [0, 22], sizes = [8, 106], strides = [1, 1]} : vector<8x128xf32> to vector<8x106xf32>
    %190 = tpu.concatenate %189, %188 in 1 : vector<8x106xf32>, vector<8x22xf32> -> vector<8x128xf32>
    %cst_84 = arith.constant 0.000000e+00 : f32
    %191 = vector.broadcast %cst_84 : f32 to vector<8x23xf32>
    %192 = vector.extract_strided_slice %160 {offsets = [0, 23], sizes = [8, 105], strides = [1, 1]} : vector<8x128xf32> to vector<8x105xf32>
    %193 = tpu.concatenate %192, %191 in 1 : vector<8x105xf32>, vector<8x23xf32> -> vector<8x128xf32>
    %cst_85 = arith.constant 0.000000e+00 : f32
    %194 = vector.broadcast %cst_85 : f32 to vector<8x30xf32>
    %195 = vector.extract_strided_slice %160 {offsets = [0, 30], sizes = [8, 98], strides = [1, 1]} : vector<8x128xf32> to vector<8x98xf32>
    %196 = tpu.concatenate %195, %194 in 1 : vector<8x98xf32>, vector<8x30xf32> -> vector<8x128xf32>
    %cst_86 = arith.constant 0.000000e+00 : f32
    %197 = vector.broadcast %cst_86 : f32 to vector<8x31xf32>
    %198 = vector.extract_strided_slice %160 {offsets = [0, 31], sizes = [8, 97], strides = [1, 1]} : vector<8x128xf32> to vector<8x97xf32>
    %199 = tpu.concatenate %198, %197 in 1 : vector<8x97xf32>, vector<8x31xf32> -> vector<8x128xf32>
    %cst_87 = arith.constant 0.000000e+00 : f32
    %200 = vector.broadcast %cst_87 : f32 to vector<8x32xf32>
    %201 = vector.extract_strided_slice %160 {offsets = [0, 32], sizes = [8, 96], strides = [1, 1]} : vector<8x128xf32> to vector<8x96xf32>
    %202 = tpu.concatenate %201, %200 in 1 : vector<8x96xf32>, vector<8x32xf32> -> vector<8x128xf32>
    %cst_88 = arith.constant 0.000000e+00 : f32
    %203 = vector.broadcast %cst_88 : f32 to vector<8x33xf32>
    %204 = vector.extract_strided_slice %160 {offsets = [0, 33], sizes = [8, 95], strides = [1, 1]} : vector<8x128xf32> to vector<8x95xf32>
    %205 = tpu.concatenate %204, %203 in 1 : vector<8x95xf32>, vector<8x33xf32> -> vector<8x128xf32>
    %206 = tpu.concatenate %160, %163, %166, %169, %172, %175, %178, %181, %184, %187, %190, %193, %196, %199, %202, %205 in 0 : vector<8x128xf32>, vector<8x128xf32>, vector<8x128xf32>, vector<8x128xf32>, vector<8x128xf32>, vector<8x128xf32>, vector<8x128xf32>, vector<8x128xf32>, vector<8x128xf32>, vector<8x128xf32>, vector<8x128xf32>, vector<8x128xf32>, vector<8x128xf32>, vector<8x128xf32>, vector<8x128xf32>, vector<8x128xf32> -> vector<128x128xf32>
    %207 = arith.truncf %121 : vector<16x128xf32> to vector<16x128xbf16>
    %208 = arith.truncf %206 : vector<128x128xf32> to vector<128x128xbf16>
    %cst_89 = arith.constant dense<0.000000e+00> : vector<16x128xf32>
    %209 = tpu.matmul %207, %208, %cst_89 {dimension_numbers = #tpu.dot_dimension_numbers<[1], [0], [0], [1], [0, 0, 1, 1], [], []>} : vector<16x128xbf16>, vector<128x128xbf16>, vector<16x128xf32> -> vector<16x128xf32>
    %210 = vector.broadcast %122 : vector<16x1xf32> to vector<16x128xf32>
    %211 = arith.addf %209, %210 : vector<16x128xf32>
    %cst_90 = arith.constant 0.000000e+00 : f32
    %212 = vector.broadcast %cst_90 : f32 to vector<16x128xf32>
    %213 = arith.cmpf ogt, %211, %212 : vector<16x128xf32>
    %cst_91 = arith.constant 2.000000e-01 : f32
    %214 = vector.broadcast %cst_91 : f32 to vector<16x128xf32>
    %215 = arith.mulf %214, %211 : vector<16x128xf32>
    %216 = arith.select %213, %211, %215 : vector<16x128xi1>, vector<16x128xf32>
    %cst_92 = arith.constant dense<0.000000e+00> : vector<16x128xf32>
    %217 = tpu.matmul %216, %118, %cst_92 {dimension_numbers = #tpu.dot_dimension_numbers<[1], [0], [0], [1], [0, 0, 1, 1], [], []>} : vector<16x128xf32>, vector<128x128xf32>, vector<16x128xf32> -> vector<16x128xf32>
    %218 = vector.broadcast %123 : vector<16x1xf32> to vector<16x128xf32>
    %219 = arith.mulf %217, %218 : vector<16x128xf32>
    %cst_93 = arith.constant dense<0.000000e+00> : vector<128xf32>
    %220 = vector.multi_reduction <add>, %219, %cst_93 [0] : vector<16x128xf32> to vector<128xf32>
    %221 = vector.shape_cast %220 : vector<128xf32> to vector<1x128xf32>
    %222 = arith.addf %114, %221 : vector<1x128xf32>
    %c0_94 = arith.constant 0 : index
    %c0_95 = arith.constant 0 : index
    %223 = vector.load %arg7[%c0_94, %c0_95] : memref<1x128xf32, #tpu.memory_space<vmem>>, vector<1x128xf32>
    %224 = arith.addf %222, %223 : vector<1x128xf32>
    %c0_96 = arith.constant 0 : index
    %c0_97 = arith.constant 0 : index
    %c0_98 = arith.constant 0 : index
    %225 = vector.load %arg18[%c0_96, %c0_97, %c0_98] : memref<1x1x128xf32, #tpu.memory_space<vmem>>, vector<1x1x128xf32>
    %226 = vector.shape_cast %225 : vector<1x1x128xf32> to vector<1x128xf32>
    %227 = vector.shape_cast %224 : vector<1x128xf32> to vector<1x1x128xf32>
    tpu.vector_store %arg18[%c0_96, %c0_97, %c0_98], %227 {strides = array<i32>} : memref<1x1x128xf32, #tpu.memory_space<vmem>>, vector<1x1x128xf32>,
    return
  }
  func.func @transform_0(%arg0: i32) -> (i32, i32, i32) {
    %c0_i32 = arith.constant 0 : i32
    %c0_i32_0 = arith.constant 0 : i32
    %c0_i32_1 = arith.constant 0 : i32
    return %arg0, %c0_i32, %c0_i32_0 : i32, i32, i32
  }
  func.func @transform_1(%arg0: i32) -> (i32, i32) {
    %c0_i32 = arith.constant 0 : i32
    %c0_i32_0 = arith.constant 0 : i32
    %c0_i32_1 = arith.constant 0 : i32
    return %c0_i32, %c0_i32_0 : i32, i32
  }
  func.func @transform_2(%arg0: i32) -> (i32, i32) {
    %c0_i32 = arith.constant 0 : i32
    %c0_i32_0 = arith.constant 0 : i32
    %c0_i32_1 = arith.constant 0 : i32
    return %c0_i32, %c0_i32_0 : i32, i32
  }
  func.func @transform_3(%arg0: i32) -> (i32, i32) {
    %c0_i32 = arith.constant 0 : i32
    %c0_i32_0 = arith.constant 0 : i32
    %c0_i32_1 = arith.constant 0 : i32
    return %c0_i32, %c0_i32_0 : i32, i32
  }
  func.func @transform_4(%arg0: i32) -> (i32, i32) {
    %c0_i32 = arith.constant 0 : i32
    %c0_i32_0 = arith.constant 0 : i32
    %c0_i32_1 = arith.constant 0 : i32
    return %c0_i32, %c0_i32_0 : i32, i32
  }
  func.func @transform_5(%arg0: i32) -> (i32, i32) {
    %c0_i32 = arith.constant 0 : i32
    %c0_i32_0 = arith.constant 0 : i32
    %c0_i32_1 = arith.constant 0 : i32
    return %c0_i32, %c0_i32_0 : i32, i32
  }
  func.func @transform_6(%arg0: i32) -> (i32, i32) {
    %c0_i32 = arith.constant 0 : i32
    %c0_i32_0 = arith.constant 0 : i32
    %c0_i32_1 = arith.constant 0 : i32
    return %c0_i32, %c0_i32_0 : i32, i32
  }
  func.func @transform_7(%arg0: i32) -> (i32, i32) {
    %c0_i32 = arith.constant 0 : i32
    %c0_i32_0 = arith.constant 0 : i32
    %c0_i32_1 = arith.constant 0 : i32
    return %c0_i32, %c0_i32_0 : i32, i32
  }
  func.func @transform_8(%arg0: i32) -> (i32, i32) {
    %c0_i32 = arith.constant 0 : i32
    %c0_i32_0 = arith.constant 0 : i32
    %c0_i32_1 = arith.constant 0 : i32
    return %c0_i32, %c0_i32_0 : i32, i32
  }
  func.func @transform_9(%arg0: i32) -> (i32, i32) {
    %c0_i32 = arith.constant 0 : i32
    %c0_i32_0 = arith.constant 0 : i32
    %c0_i32_1 = arith.constant 0 : i32
    return %c0_i32, %c0_i32_0 : i32, i32
  }
  func.func @transform_10(%arg0: i32) -> (i32, i32) {
    %c0_i32 = arith.constant 0 : i32
    %c0_i32_0 = arith.constant 0 : i32
    %c0_i32_1 = arith.constant 0 : i32
    return %c0_i32, %c0_i32_0 : i32, i32
  }
  func.func @transform_11(%arg0: i32) -> (i32, i32) {
    %c0_i32 = arith.constant 0 : i32
    %c0_i32_0 = arith.constant 0 : i32
    %c0_i32_1 = arith.constant 0 : i32
    return %c0_i32, %c0_i32_0 : i32, i32
  }
  func.func @transform_12(%arg0: i32) -> (i32, i32) {
    %c0_i32 = arith.constant 0 : i32
    %c0_i32_0 = arith.constant 0 : i32
    %c0_i32_1 = arith.constant 0 : i32
    return %c0_i32, %c0_i32_0 : i32, i32
  }
  func.func @transform_13(%arg0: i32) -> (i32, i32) {
    %c0_i32 = arith.constant 0 : i32
    %c0_i32_0 = arith.constant 0 : i32
    %c0_i32_1 = arith.constant 0 : i32
    return %c0_i32, %c0_i32_0 : i32, i32
  }
  func.func @transform_14(%arg0: i32) -> (i32, i32) {
    %c0_i32 = arith.constant 0 : i32
    %c0_i32_0 = arith.constant 0 : i32
    %c0_i32_1 = arith.constant 0 : i32
    return %c0_i32, %c0_i32_0 : i32, i32
  }
  func.func @transform_15(%arg0: i32) -> (i32, i32) {
    %c0_i32 = arith.constant 0 : i32
    %c0_i32_0 = arith.constant 0 : i32
    %c0_i32_1 = arith.constant 0 : i32
    return %c0_i32, %c0_i32_0 : i32, i32
  }
  func.func @transform_16(%arg0: i32) -> (i32, i32) {
    %c0_i32 = arith.constant 0 : i32
    %c0_i32_0 = arith.constant 0 : i32
    %c0_i32_1 = arith.constant 0 : i32
    return %c0_i32, %c0_i32_0 : i32, i32
  }
  func.func @transform_17(%arg0: i32) -> (i32, i32, i32) {
    %c0_i32 = arith.constant 0 : i32
    %c0_i32_0 = arith.constant 0 : i32
    %c0_i32_1 = arith.constant 0 : i32
    return %arg0, %c0_i32, %c0_i32_0 : i32, i32, i32
  }
}

</mosaic_0001>

<llo_original>
// kernel: squeeze.2
$region0: #{squeeze.2}
  %s0 = inlined_call_operand.vmem [shape: f32[2,64], index: 0, kind: input, shape index: {}]
  %s1 = inlined_call_operand.hbm [shape: f32[2,1,8,8], index: 1, kind: output, shape index: {}]
  $region1: #{squeeze.2} parent=0
    #allocation0 [shape = 'u8[8192]{0}', space=vmem, size = 0x2000, scoped, tag = 'operand span for operand 1']
    #allocation1 [shape = 's32[1]{0}', space=sflag, size = 0x4, scoped, tag = 'scoped memory for squeeze.2']
    #allocation2 [shape = 'u8[4096]{0}', space=vmem, size = 0x1000, scoped, tag = 'scoped mem for input reshape']
    %2 = vsyncpa [#allocation1], 0
    %s4 = sshllo.u32 0, 2
    %v5 = vld [vmem:[%s0] sm:%s4]
    %6 = vst [vmem:[#allocation2] sm:%s4] %v5
    %v7 = vld [vmem:[#allocation2] sm:$0x3]
    %vm8 = vcmask 64512
    %9 = vst.msk [vmem:[#allocation0] ss:$8 sm:$0x3] %vm8, %v7
    %v10 = vld [vmem:[#allocation2] sm:$0x3]
    %11 = vrot.lane.b32.xlu0 %v10, 120
    %v12 = vpop.permute.xlu0 %11
    %vm13 = vcmask 64512
    %s14 = scalar_lea.vmem [#allocation0], 1
    %15 = vst.msk [vmem:[%s14] ss:$8 sm:$0x3] %vm13, %v12
    %v16 = vld [vmem:[#allocation2] sm:$0x3]
    %17 = vrot.lane.b32.xlu0 %v16, 112
    %v18 = vpop.permute.xlu0 %17
    %vm19 = vcmask 64512
    %s20 = scalar_lea.vmem [#allocation0], 2
    %21 = vst.msk [vmem:[%s20] ss:$8 sm:$0x3] %vm19, %v18
    %v22 = vld [vmem:[#allocation2] sm:$0x3]
    %23 = vrot.lane.b32.xlu0 %v22, 104
    %v24 = vpop.permute.xlu0 %23
    %vm25 = vcmask 64512
    %s26 = scalar_lea.vmem [#allocation0], 3
    %27 = vst.msk [vmem:[%s26] ss:$8 sm:$0x3] %vm25, %v24
    %v28 = vld [vmem:[#allocation2] sm:$0x3]
    %29 = vrot.lane.b32.xlu0 %v28, 96
    %v30 = vpop.permute.xlu0 %29
    %vm31 = vcmask 64512
    %s32 = scalar_lea.vmem [#allocation0], 4
    %33 = vst.msk [vmem:[%s32] ss:$8 sm:$0x3] %vm31, %v30
    %v34 = vld [vmem:[#allocation2] sm:$0x3]
    %35 = vrot.lane.b32.xlu0 %v34, 88
    %v36 = vpop.permute.xlu0 %35
    %vm37 = vcmask 64512
    %s38 = scalar_lea.vmem [#allocation0], 5
    %39 = vst.msk [vmem:[%s38] ss:$8 sm:$0x3] %vm37, %v36
    %v40 = vld [vmem:[#allocation2] sm:$0x3]
    %41 = vrot.lane.b32.xlu0 %v40, 80
    %v42 = vpop.permute.xlu0 %41
    %vm43 = vcmask 64512
    %s44 = scalar_lea.vmem [#allocation0], 6
    %45 = vst.msk [vmem:[%s44] ss:$8 sm:$0x3] %vm43, %v42
    %v46 = vld [vmem:[#allocation2] sm:$0x3]
    %47 = vrot.lane.b32.xlu0 %v46, 72
    %v48 = vpop.permute.xlu0 %47
    %vm49 = vcmask 64512
    %s50 = scalar_lea.vmem [#allocation0], 7
    %51 = vst.msk [vmem:[%s50] ss:$8 sm:$0x3] %vm49, %v48
    %s53 = ssub.s32 256, 256
    %54 = vsyncadd [#allocation1], %s53
    %s56 = sshll.u32 [#allocation0], 4
    %s57 = int_to_ptr.vmem [resolvable:$true] %s56
    %59 = dma.vmem_to_hbm [thread:$0]  %s57, 256, %s1, [#allocation1]
    %60 = dma.done [#allocation1], 256
    %61 = vsyncpa [#allocation1], 1

// kernel: squeeze.3
$region0: #{squeeze.3}
  %s0 = inlined_call_operand.vmem [shape: f32[2,16], index: 0, kind: input, shape index: {}]
  %s1 = inlined_call_operand.hbm [shape: f32[2,1,4,4], index: 1, kind: output, shape index: {}]
  $region1: #{squeeze.3} parent=0
    #allocation0 [shape = 'u8[4096]{0}', space=vmem, size = 0x1000, scoped, tag = 'operand span for operand 1']
    #allocation1 [shape = 's32[1]{0}', space=sflag, size = 0x4, scoped, tag = 'scoped memory for squeeze.3']
    #allocation2 [shape = 'u8[8192]{0}', space=vmem, size = 0x2000, scoped, tag = 'scoped mem for output reshape']
    #allocation3 [shape = 'u8[4096]{0}', space=vmem, size = 0x1000, scoped, tag = 'scoped mem for input reshape']
    %2 = vsyncpa [#allocation1], 0
    %s4 = sshllo.u32 0, 2
    %v5 = vld [vmem:[%s0] sm:%s4]
    %6 = vst [vmem:[#allocation3] sm:%s4] %v5
    %v7 = vld [vmem:[#allocation3] sm:$0x3]
    %vm8 = vcmask 31744
    %9 = vst.msk [vmem:[#allocation2] ss:$8 sm:$0x3] %vm8, %v7
    %v10 = vld [vmem:[#allocation3] sm:$0x3]
    %11 = vrot.lane.b32.xlu0 %v10, 124
    %v12 = vpop.permute.xlu0 %11
    %vm13 = vcmask 31744
    %s14 = scalar_lea.vmem [#allocation2], 1
    %15 = vst.msk [vmem:[%s14] ss:$8 sm:$0x3] %vm13, %v12
    %v16 = vld [vmem:[#allocation3] sm:$0x3]
    %17 = vrot.lane.b32.xlu0 %v16, 120
    %v18 = vpop.permute.xlu0 %17
    %vm19 = vcmask 31744
    %s20 = scalar_lea.vmem [#allocation2], 2
    %21 = vst.msk [vmem:[%s20] ss:$8 sm:$0x3] %vm19, %v18
    %v22 = vld [vmem:[#allocation3] sm:$0x3]
    %23 = vrot.lane.b32.xlu0 %v22, 116
    %v24 = vpop.permute.xlu0 %23
    %vm25 = vcmask 31744
    %s26 = scalar_lea.vmem [#allocation2], 3
    %27 = vst.msk [vmem:[%s26] ss:$8 sm:$0x3] %vm25, %v24
    %s29 = sshllo.u32 0, 4
    %v31 = vld [vmem:[#allocation2] sm:%s29]
    %s32 = sshllo.u32 0, 4
    %33 = vst [vmem:[#allocation0] sm:%s32] %v31
    %s34 = scalar_lea.vmem [#allocation2], 8
    %v35 = vld [vmem:[%s34] sm:%s29]
    %s36 = sshllo.u32 0, 4
    %s37 = scalar_lea.vmem [#allocation0], 4
    %38 = vst [vmem:[%s37] sm:%s36] %v35
    %s40 = ssub.s32 128, 128
    %41 = vsyncadd [#allocation1], %s40
    %s43 = sshll.u32 [#allocation0], 4
    %s44 = int_to_ptr.vmem [resolvable:$true] %s43
    %46 = dma.vmem_to_hbm [thread:$0]  %s44, 128, %s1, [#allocation1]
    %47 = dma.done [#allocation1], 128
    %48 = vsyncpa [#allocation1], 1

// kernel: ms_image_dis_council_forward.1
$region0: #{ms_image_dis_council_forward.1}
  #allocation0 [shape = 'u32[]', space=smem, size = 0x4, offset = 0x4, fixed_abs, tag = 'smem constant byte address 0x4 - core index']
  #allocation1 [shape = 'u32[144,128]{1,0:T(1,128)}', space=vmem, size = 0x12000, scoped, tag = 'internal scratch']
  %s0 = inlined_call_operand.vmem [shape: f32[2,8,384], index: 0, kind: input, shape index: {}]
  %s1 = inlined_call_operand.vmem [shape: f32[1,384], index: 1, kind: input, shape index: {}]
  %s2 = inlined_call_operand.vmem [shape: f32[384,128], index: 2, kind: input, shape index: {}]
  %s3 = inlined_call_operand.vmem [shape: f32[384,128], index: 3, kind: input, shape index: {}]
  %s4 = inlined_call_operand.vmem [shape: f32[1,128], index: 4, kind: input, shape index: {}]
  %s5 = inlined_call_operand.vmem [shape: f32[128,128], index: 5, kind: input, shape index: {}]
  %s6 = inlined_call_operand.vmem [shape: f32[1,128], index: 6, kind: input, shape index: {}]
  %s7 = inlined_call_operand.vmem [shape: f32[8,72], index: 7, kind: input, shape index: {}]
  %s8 = inlined_call_operand.vmem [shape: f32[8,1], index: 8, kind: input, shape index: {}]
  %s9 = inlined_call_operand.vmem [shape: f32[16,128], index: 9, kind: input, shape index: {}]
  %s10 = inlined_call_operand.vmem [shape: f32[16,1], index: 10, kind: input, shape index: {}]
  %s11 = inlined_call_operand.vmem [shape: f32[16,1], index: 11, kind: input, shape index: {}]
  %s12 = inlined_call_operand.vmem [shape: f32[8,72], index: 12, kind: input, shape index: {}]
  %s13 = inlined_call_operand.vmem [shape: f32[8,1], index: 13, kind: input, shape index: {}]
  %s14 = inlined_call_operand.vmem [shape: f32[16,128], index: 14, kind: input, shape index: {}]
  %s15 = inlined_call_operand.vmem [shape: f32[16,1], index: 15, kind: input, shape index: {}]
  %s16 = inlined_call_operand.vmem [shape: f32[16,1], index: 16, kind: input, shape index: {}]
  %s17 = inlined_call_operand.vmem [shape: f32[2,1,128], index: 17, kind: output, shape index: {}]
  %s18 = sld [smem:[#allocation0]]
  $region101: #{ms_image_dis_council_forward.1} parent=0
    _
  %s20 = ssub.s32 1, %s18
  %s21 = scalar_select 0, %s20, %s18
  loop: start=0, step=1, limit=4
  $region2: #{ms_image_dis_council_forward.1} parent=0 // loop_pre_header
    _
  $region3: #{ms_image_dis_council_forward.1} parent=0 // loop_header
    %s23 = sphi 0, %s27
    %p24 = scmp.ge.s32.totalorder %s23, 4
    %s33 = sphi 0, %s35
    %s36 = sphi 0, %s33
    %s37 = sphi 0, %s36
    %s53 = sphi 0, %s37
    %s57 = sphi 0, %s57
    %s59 = sphi 0, %s57
    %s60 = sphi 0, %s59
    %s74 = sphi 0, %s60
    %s78 = sphi 0, %s78
    %s80 = sphi 0, %s78
    %s81 = sphi 0, %s80
    %s95 = sphi 0, %s81
    %s99 = sphi 0, %s99
    %s101 = sphi 0, %s99
    %s102 = sphi 0, %s101
    %s116 = sphi 0, %s102
    %s120 = sphi 0, %s120
    %s122 = sphi 0, %s120
    %s123 = sphi 0, %s122
    %s137 = sphi 0, %s123
    %s141 = sphi 0, %s141
    %s143 = sphi 0, %s141
    %s144 = sphi 0, %s143
    %s158 = sphi 0, %s144
    %s162 = sphi 0, %s162
    %s164 = sphi 0, %s162
    %s165 = sphi 0, %s164
    %s179 = sphi 0, %s165
    %s183 = sphi 0, %s183
    %s185 = sphi 0, %s183
    %s186 = sphi 0, %s185
    %s200 = sphi 0, %s186
    %s204 = sphi 0, %s204
    %s206 = sphi 0, %s204
    %s207 = sphi 0, %s206
    %s221 = sphi 0, %s207
    %s225 = sphi 0, %s225
    %s227 = sphi 0, %s225
    %s228 = sphi 0, %s227
    %s242 = sphi 0, %s228
    %s246 = sphi 0, %s246
    %s248 = sphi 0, %s246
    %s249 = sphi 0, %s248
    %s263 = sphi 0, %s249
    %s267 = sphi 0, %s267
    %s269 = sphi 0, %s267
    %s270 = sphi 0, %s269
    %s284 = sphi 0, %s270
    %s288 = sphi 0, %s288
    %s290 = sphi 0, %s288
    %s291 = sphi 0, %s290
    %s305 = sphi 0, %s291
    %s309 = sphi 0, %s309
    %s311 = sphi 0, %s309
    %s312 = sphi 0, %s311
    %s326 = sphi 0, %s312
    %s330 = sphi 0, %s330
    %s332 = sphi 0, %s330
    %s333 = sphi 0, %s332
    %s347 = sphi 0, %s333
    %s351 = sphi 0, %s351
    %s353 = sphi 0, %s351
    %s354 = sphi 0, %s353
    %s368 = sphi 0, %s354
    %s372 = sphi 0, %s372
    %s374 = sphi 0, %s372
    %s375 = sphi 0, %s374
    %s389 = sphi 0, %s375
    %s395 = sphi 0, %s397
    %s398 = sphi 0, %s395
    %s399 = sphi 0, %s398
    %s415 = sphi 0, %s399
  $region4: #{ms_image_dis_council_forward.1} parent=0 // loop_header_branch
    %26 = sbr.rel (%p24) target = $region8
  $region5: #{ms_image_dis_council_forward.1} parent=0 // loop_body
    %s28 = ssub.s32 %s23, 1
    %s29 = ssub.s32 %s23, 2
    %s30 = sadd.s32 %s23, 1
    %s31 = ssub.s32 %s23, %s30
    %p32 = scmp.eq.s32.totalorder %s31, 0
    %s34 = sadd.s32 %s33, 1
    %s35 = scalar_select %p32, %s33, %s34
    %p38 = pneg %p32
    %p39 = scmp.eq.s32.totalorder %s23, 1
    %p40 = por %p38, %p39
    %p41 = scmp.ne.s32.totalorder %s33, %s36
    %p42 = scmp.eq.s32.totalorder %s23, 0
    %p43 = por %p41, %p42
    %p44 = scmp.ne.s32.totalorder %s33, %s36
    %p45 = scmp.eq.s32.totalorder %s28, 1
    %p46 = por %p44, %p45
    %p47 = scmp.ne.s32.totalorder %s36, %s37
    %p48 = scmp.eq.s32.totalorder %s28, 0
    %p49 = por %p47, %p48
    %p50 = scmp.ne.s32.totalorder %s36, %s37
    %p51 = scmp.eq.s32.totalorder %s29, 1
    %p52 = por %p50, %p51
    %p54 = scmp.ne.s32.totalorder %s37, %s53
    %p55 = scmp.eq.s32.totalorder %s29, 0
    %p56 = por %p54, %p55
    %s58 = sadd.s32 %s57, 1
    %p61 = scmp.eq.s32.totalorder %s23, 1
    %p62 = scmp.ne.s32.totalorder %s57, %s59
    %p63 = scmp.eq.s32.totalorder %s23, 0
    %p64 = por %p62, %p63
    %p65 = scmp.ne.s32.totalorder %s57, %s59
    %p66 = scmp.eq.s32.totalorder %s28, 1
    %p67 = por %p65, %p66
    %p68 = scmp.ne.s32.totalorder %s59, %s60
    %p69 = scmp.eq.s32.totalorder %s28, 0
    %p70 = por %p68, %p69
    %p71 = scmp.ne.s32.totalorder %s59, %s60
    %p72 = scmp.eq.s32.totalorder %s29, 1
    %p73 = por %p71, %p72
    %p75 = scmp.ne.s32.totalorder %s60, %s74
    %p76 = scmp.eq.s32.totalorder %s29, 0
    %p77 = por %p75, %p76
    %s79 = sadd.s32 %s78, 1
    %p82 = scmp.eq.s32.totalorder %s23, 1
    %p83 = scmp.ne.s32.totalorder %s78, %s80
    %p84 = scmp.eq.s32.totalorder %s23, 0
    %p85 = por %p83, %p84
    %p86 = scmp.ne.s32.totalorder %s78, %s80
    %p87 = scmp.eq.s32.totalorder %s28, 1
    %p88 = por %p86, %p87
    %p89 = scmp.ne.s32.totalorder %s80, %s81
    %p90 = scmp.eq.s32.totalorder %s28, 0
    %p91 = por %p89, %p90
    %p92 = scmp.ne.s32.totalorder %s80, %s81
    %p93 = scmp.eq.s32.totalorder %s29, 1
    %p94 = por %p92, %p93
    %p96 = scmp.ne.s32.totalorder %s81, %s95
    %p97 = scmp.eq.s32.totalorder %s29, 0
    %p98 = por %p96, %p97
    %s100 = sadd.s32 %s99, 1
    %p103 = scmp.eq.s32.totalorder %s23, 1
    %p104 = scmp.ne.s32.totalorder %s99, %s101
    %p105 = scmp.eq.s32.totalorder %s23, 0
    %p106 = por %p104, %p105
    %p107 = scmp.ne.s32.totalorder %s99, %s101
    %p108 = scmp.eq.s32.totalorder %s28, 1
    %p109 = por %p107, %p108
    %p110 = scmp.ne.s32.totalorder %s101, %s102
    %p111 = scmp.eq.s32.totalorder %s28, 0
    %p112 = por %p110, %p111
    %p113 = scmp.ne.s32.totalorder %s101, %s102
    %p114 = scmp.eq.s32.totalorder %s29, 1
    %p115 = por %p113, %p114
    %p117 = scmp.ne.s32.totalorder %s102, %s116
    %p118 = scmp.eq.s32.totalorder %s29, 0
    %p119 = por %p117, %p118
    %s121 = sadd.s32 %s120, 1
    %p124 = scmp.eq.s32.totalorder %s23, 1
    %p125 = scmp.ne.s32.totalorder %s120, %s122
    %p126 = scmp.eq.s32.totalorder %s23, 0
    %p127 = por %p125, %p126
    %p128 = scmp.ne.s32.totalorder %s120, %s122
    %p129 = scmp.eq.s32.totalorder %s28, 1
    %p130 = por %p128, %p129
    %p131 = scmp.ne.s32.totalorder %s122, %s123
    %p132 = scmp.eq.s32.totalorder %s28, 0
    %p133 = por %p131, %p132
    %p134 = scmp.ne.s32.totalorder %s122, %s123
    %p135 = scmp.eq.s32.totalorder %s29, 1
    %p136 = por %p134, %p135
    %p138 = scmp.ne.s32.totalorder %s123, %s137
    %p139 = scmp.eq.s32.totalorder %s29, 0
    %p140 = por %p138, %p139
    %s142 = sadd.s32 %s141, 1
    %p145 = scmp.eq.s32.totalorder %s23, 1
    %p146 = scmp.ne.s32.totalorder %s141, %s143
    %p147 = scmp.eq.s32.totalorder %s23, 0
    %p148 = por %p146, %p147
    %p149 = scmp.ne.s32.totalorder %s141, %s143
    %p150 = scmp.eq.s32.totalorder %s28, 1
    %p151 = por %p149, %p150
    %p152 = scmp.ne.s32.totalorder %s143, %s144
    %p153 = scmp.eq.s32.totalorder %s28, 0
    %p154 = por %p152, %p153
    %p155 = scmp.ne.s32.totalorder %s143, %s144
    %p156 = scmp.eq.s32.totalorder %s29, 1
    %p157 = por %p155, %p156
    %p159 = scmp.ne.s32.totalorder %s144, %s158
    %p160 = scmp.eq.s32.totalorder %s29, 0
    %p161 = por %p159, %p160
    %s163 = sadd.s32 %s162, 1
    %p166 = scmp.eq.s32.totalorder %s23, 1
    %p167 = scmp.ne.s32.totalorder %s162, %s164
    %p168 = scmp.eq.s32.totalorder %s23, 0
    %p169 = por %p167, %p168
    %p170 = scmp.ne.s32.totalorder %s162, %s164
    %p171 = scmp.eq.s32.totalorder %s28, 1
    %p172 = por %p170, %p171
    %p173 = scmp.ne.s32.totalorder %s164, %s165
    %p174 = scmp.eq.s32.totalorder %s28, 0
    %p175 = por %p173, %p174
    %p176 = scmp.ne.s32.totalorder %s164, %s165
    %p177 = scmp.eq.s32.totalorder %s29, 1
    %p178 = por %p176, %p177
    %p180 = scmp.ne.s32.totalorder %s165, %s179
    %p181 = scmp.eq.s32.totalorder %s29, 0
    %p182 = por %p180, %p181
    %s184 = sadd.s32 %s183, 1
    %p187 = scmp.eq.s32.totalorder %s23, 1
    %p188 = scmp.ne.s32.totalorder %s183, %s185
    %p189 = scmp.eq.s32.totalorder %s23, 0
    %p190 = por %p188, %p189
    %p191 = scmp.ne.s32.totalorder %s183, %s185
    %p192 = scmp.eq.s32.totalorder %s28, 1
    %p193 = por %p191, %p192
    %p194 = scmp.ne.s32.totalorder %s185, %s186
    %p195 = scmp.eq.s32.totalorder %s28, 0
    %p196 = por %p194, %p195
    %p197 = scmp.ne.s32.totalorder %s185, %s186
    %p198 = scmp.eq.s32.totalorder %s29, 1
    %p199 = por %p197, %p198
    %p201 = scmp.ne.s32.totalorder %s186, %s200
    %p202 = scmp.eq.s32.totalorder %s29, 0
    %p203 = por %p201, %p202
    %s205 = sadd.s32 %s204, 1
    %p208 = scmp.eq.s32.totalorder %s23, 1
    %p209 = scmp.ne.s32.totalorder %s204, %s206
    %p210 = scmp.eq.s32.totalorder %s23, 0
    %p211 = por %p209, %p210
    %p212 = scmp.ne.s32.totalorder %s204, %s206
    %p213 = scmp.eq.s32.totalorder %s28, 1
    %p214 = por %p212, %p213
    %p215 = scmp.ne.s32.totalorder %s206, %s207
    %p216 = scmp.eq.s32.totalorder %s28, 0
    %p217 = por %p215, %p216
    %p218 = scmp.ne.s32.totalorder %s206, %s207
    %p219 = scmp.eq.s32.totalorder %s29, 1
    %p220 = por %p218, %p219
    %p222 = scmp.ne.s32.totalorder %s207, %s221
    %p223 = scmp.eq.s32.totalorder %s29, 0
    %p224 = por %p222, %p223
    %s226 = sadd.s32 %s225, 1
    %p229 = scmp.eq.s32.totalorder %s23, 1
    %p230 = scmp.ne.s32.totalorder %s225, %s227
    %p231 = scmp.eq.s32.totalorder %s23, 0
    %p232 = por %p230, %p231
    %p233 = scmp.ne.s32.totalorder %s225, %s227
    %p234 = scmp.eq.s32.totalorder %s28, 1
    %p235 = por %p233, %p234
    %p236 = scmp.ne.s32.totalorder %s227, %s228
    %p237 = scmp.eq.s32.totalorder %s28, 0
    %p238 = por %p236, %p237
    %p239 = scmp.ne.s32.totalorder %s227, %s228
    %p240 = scmp.eq.s32.totalorder %s29, 1
    %p241 = por %p239, %p240
    %p243 = scmp.ne.s32.totalorder %s228, %s242
    %p244 = scmp.eq.s32.totalorder %s29, 0
    %p245 = por %p243, %p244
    %s247 = sadd.s32 %s246, 1
    %p250 = scmp.eq.s32.totalorder %s23, 1
    %p251 = scmp.ne.s32.totalorder %s246, %s248
    %p252 = scmp.eq.s32.totalorder %s23, 0
    %p253 = por %p251, %p252
    %p254 = scmp.ne.s32.totalorder %s246, %s248
    %p255 = scmp.eq.s32.totalorder %s28, 1
    %p256 = por %p254, %p255
    %p257 = scmp.ne.s32.totalorder %s248, %s249
    %p258 = scmp.eq.s32.totalorder %s28, 0
    %p259 = por %p257, %p258
    %p260 = scmp.ne.s32.totalorder %s248, %s249
    %p261 = scmp.eq.s32.totalorder %s29, 1
    %p262 = por %p260, %p261
    %p264 = scmp.ne.s32.totalorder %s249, %s263
    %p265 = scmp.eq.s32.totalorder %s29, 0
    %p266 = por %p264, %p265
    %s268 = sadd.s32 %s267, 1
    %p271 = scmp.eq.s32.totalorder %s23, 1
    %p272 = scmp.ne.s32.totalorder %s267, %s269
    %p273 = scmp.eq.s32.totalorder %s23, 0
    %p274 = por %p272, %p273
    %p275 = scmp.ne.s32.totalorder %s267, %s269
    %p276 = scmp.eq.s32.totalorder %s28, 1
    %p277 = por %p275, %p276
    %p278 = scmp.ne.s32.totalorder %s269, %s270
    %p279 = scmp.eq.s32.totalorder %s28, 0
    %p280 = por %p278, %p279
    %p281 = scmp.ne.s32.totalorder %s269, %s270
    %p282 = scmp.eq.s32.totalorder %s29, 1
    %p283 = por %p281, %p282
    %p285 = scmp.ne.s32.totalorder %s270, %s284
    %p286 = scmp.eq.s32.totalorder %s29, 0
    %p287 = por %p285, %p286
    %s289 = sadd.s32 %s288, 1
    %p292 = scmp.eq.s32.totalorder %s23, 1
    %p293 = scmp.ne.s32.totalorder %s288, %s290
    %p294 = scmp.eq.s32.totalorder %s23, 0
    %p295 = por %p293, %p294
    %p296 = scmp.ne.s32.totalorder %s288, %s290
    %p297 = scmp.eq.s32.totalorder %s28, 1
    %p298 = por %p296, %p297
    %p299 = scmp.ne.s32.totalorder %s290, %s291
    %p300 = scmp.eq.s32.totalorder %s28, 0
    %p301 = por %p299, %p300
    %p302 = scmp.ne.s32.totalorder %s290, %s291
    %p303 = scmp.eq.s32.totalorder %s29, 1
    %p304 = por %p302, %p303
    %p306 = scmp.ne.s32.totalorder %s291, %s305
    %p307 = scmp.eq.s32.totalorder %s29, 0
    %p308 = por %p306, %p307
    %s310 = sadd.s32 %s309, 1
    %p313 = scmp.eq.s32.totalorder %s23, 1
    %p314 = scmp.ne.s32.totalorder %s309, %s311
    %p315 = scmp.eq.s32.totalorder %s23, 0
    %p316 = por %p314, %p315
    %p317 = scmp.ne.s32.totalorder %s309, %s311
    %p318 = scmp.eq.s32.totalorder %s28, 1
    %p319 = por %p317, %p318
    %p320 = scmp.ne.s32.totalorder %s311, %s312
    %p321 = scmp.eq.s32.totalorder %s28, 0
    %p322 = por %p320, %p321
    %p323 = scmp.ne.s32.totalorder %s311, %s312
    %p324 = scmp.eq.s32.totalorder %s29, 1
    %p325 = por %p323, %p324
    %p327 = scmp.ne.s32.totalorder %s312, %s326
    %p328 = scmp.eq.s32.totalorder %s29, 0
    %p329 = por %p327, %p328
    %s331 = sadd.s32 %s330, 1
    %p334 = scmp.eq.s32.totalorder %s23, 1
    %p335 = scmp.ne.s32.totalorder %s330, %s332
    %p336 = scmp.eq.s32.totalorder %s23, 0
    %p337 = por %p335, %p336
    %p338 = scmp.ne.s32.totalorder %s330, %s332
    %p339 = scmp.eq.s32.totalorder %s28, 1
    %p340 = por %p338, %p339
    %p341 = scmp.ne.s32.totalorder %s332, %s333
    %p342 = scmp.eq.s32.totalorder %s28, 0
    %p343 = por %p341, %p342
    %p344 = scmp.ne.s32.totalorder %s332, %s333
    %p345 = scmp.eq.s32.totalorder %s29, 1
    %p346 = por %p344, %p345
    %p348 = scmp.ne.s32.totalorder %s333, %s347
    %p349 = scmp.eq.s32.totalorder %s29, 0
    %p350 = por %p348, %p349
    %s352 = sadd.s32 %s351, 1
    %p355 = scmp.eq.s32.totalorder %s23, 1
    %p356 = scmp.ne.s32.totalorder %s351, %s353
    %p357 = scmp.eq.s32.totalorder %s23, 0
    %p358 = por %p356, %p357
    %p359 = scmp.ne.s32.totalorder %s351, %s353
    %p360 = scmp.eq.s32.totalorder %s28, 1
    %p361 = por %p359, %p360
    %p362 = scmp.ne.s32.totalorder %s353, %s354
    %p363 = scmp.eq.s32.totalorder %s28, 0
    %p364 = por %p362, %p363
    %p365 = scmp.ne.s32.totalorder %s353, %s354
    %p366 = scmp.eq.s32.totalorder %s29, 1
    %p367 = por %p365, %p366
    %p369 = scmp.ne.s32.totalorder %s354, %s368
    %p370 = scmp.eq.s32.totalorder %s29, 0
    %p371 = por %p369, %p370
    %s373 = sadd.s32 %s372, 1
    %p376 = scmp.eq.s32.totalorder %s23, 1
    %p377 = scmp.ne.s32.totalorder %s372, %s374
    %p378 = scmp.eq.s32.totalorder %s23, 0
    %p379 = por %p377, %p378
    %p380 = scmp.ne.s32.totalorder %s372, %s374
    %p381 = scmp.eq.s32.totalorder %s28, 1
    %p382 = por %p380, %p381
    %p383 = scmp.ne.s32.totalorder %s374, %s375
    %p384 = scmp.eq.s32.totalorder %s28, 0
    %p385 = por %p383, %p384
    %p386 = scmp.ne.s32.totalorder %s374, %s375
    %p387 = scmp.eq.s32.totalorder %s29, 1
    %p388 = por %p386, %p387
    %p390 = scmp.ne.s32.totalorder %s375, %s389
    %p391 = scmp.eq.s32.totalorder %s29, 0
    %p392 = por %p390, %p391
    %s393 = ssub.s32 %s23, %s30
    %p394 = scmp.eq.s32.totalorder %s393, 0
    %s396 = sadd.s32 %s395, 1
    %s397 = scalar_select %p394, %s395, %s396
    %p400 = pneg %p394
    %p401 = scmp.eq.s32.totalorder %s23, 1
    %p402 = por %p400, %p401
    %p403 = scmp.ne.s32.totalorder %s395, %s398
    %p404 = scmp.eq.s32.totalorder %s23, 0
    %p405 = por %p403, %p404
    %p406 = scmp.ne.s32.totalorder %s395, %s398
    %p407 = scmp.eq.s32.totalorder %s28, 1
    %p408 = por %p406, %p407
    %p409 = scmp.ne.s32.totalorder %s398, %s399
    %p410 = scmp.eq.s32.totalorder %s28, 0
    %p411 = por %p409, %p410
    %p412 = scmp.ne.s32.totalorder %s398, %s399
    %p413 = scmp.eq.s32.totalorder %s29, 1
    %p414 = por %p412, %p413
    %p416 = scmp.ne.s32.totalorder %s399, %s415
    %p417 = scmp.eq.s32.totalorder %s29, 0
    %p418 = por %p416, %p417
    %p419 = scmp.le.s32.totalorder 1, %s23
    %p420 = scmp.lt.s32.totalorder %s23, 3
    %p421 = pnand %p419, %p420
    %p422 = pneg %p421
    // Predicated region
    $region9: #{ms_image_dis_council_forward.1} parent=5 // pred_check
      _
    $region10: #{ms_image_dis_council_forward.1} parent=5 // pred_check_branch
      %424 = sbr.rel (%p421) target = $region12
    $region11: #{ms_image_dis_council_forward.1} parent=5 // pred_region
      %s425 = ssub.s32 %s23, 1
      // Predicated region
      $region13: #{ms_image_dis_council_forward.1} parent=11 // pred_check
        %p426 = pneg %p70
      $region14: #{ms_image_dis_council_forward.1} parent=11 // pred_check_branch
        %428 = sbr.rel (%p426) target = $region16
      $region15: #{ms_image_dis_council_forward.1} parent=11 // pred_region
        _
      $region16: #{ms_image_dis_council_forward.1} parent=11 // pred_fallthru
        _
      // Predicated region
      $region17: #{ms_image_dis_council_forward.1} parent=11 // pred_check
        %p429 = pneg %p91
      $region18: #{ms_image_dis_council_forward.1} parent=11 // pred_check_branch
        %431 = sbr.rel (%p429) target = $region20
      $region19: #{ms_image_dis_council_forward.1} parent=11 // pred_region
        _
      $region20: #{ms_image_dis_council_forward.1} parent=11 // pred_fallthru
        _
      // Predicated region
      $region21: #{ms_image_dis_council_forward.1} parent=11 // pred_check
        %p432 = pneg %p112
      $region22: #{ms_image_dis_council_forward.1} parent=11 // pred_check_branch
        %434 = sbr.rel (%p432) target = $region24
      $region23: #{ms_image_dis_council_forward.1} parent=11 // pred_region
        _
      $region24: #{ms_image_dis_council_forward.1} parent=11 // pred_fallthru
        _
      // Predicated region
      $region25: #{ms_image_dis_council_forward.1} parent=11 // pred_check
        %p435 = pneg %p133
      $region26: #{ms_image_dis_council_forward.1} parent=11 // pred_check_branch
        %437 = sbr.rel (%p435) target = $region28
      $region27: #{ms_image_dis_council_forward.1} parent=11 // pred_region
        _
      $region28: #{ms_image_dis_council_forward.1} parent=11 // pred_fallthru
        _
      // Predicated region
      $region29: #{ms_image_dis_council_forward.1} parent=11 // pred_check
        %p438 = pneg %p154
      $region30: #{ms_image_dis_council_forward.1} parent=11 // pred_check_branch
        %440 = sbr.rel (%p438) target = $region32
      $region31: #{ms_image_dis_council_forward.1} parent=11 // pred_region
        _
      $region32: #{ms_image_dis_council_forward.1} parent=11 // pred_fallthru
        _
      // Predicated region
      $region33: #{ms_image_dis_council_forward.1} parent=11 // pred_check
        %p441 = pneg %p175
      $region34: #{ms_image_dis_council_forward.1} parent=11 // pred_check_branch
        %443 = sbr.rel (%p441) target = $region36
      $region35: #{ms_image_dis_council_forward.1} parent=11 // pred_region
        _
      $region36: #{ms_image_dis_council_forward.1} parent=11 // pred_fallthru
        _
      // Predicated region
      $region37: #{ms_image_dis_council_forward.1} parent=11 // pred_check
        %p444 = pneg %p196
      $region38: #{ms_image_dis_council_forward.1} parent=11 // pred_check_branch
        %446 = sbr.rel (%p444) target = $region40
      $region39: #{ms_image_dis_council_forward.1} parent=11 // pred_region
        _
      $region40: #{ms_image_dis_council_forward.1} parent=11 // pred_fallthru
        _
      // Predicated region
      $region41: #{ms_image_dis_council_forward.1} parent=11 // pred_check
        %p447 = pneg %p217
      $region42: #{ms_image_dis_council_forward.1} parent=11 // pred_check_branch
        %449 = sbr.rel (%p447) target = $region44
      $region43: #{ms_image_dis_council_forward.1} parent=11 // pred_region
        _
      $region44: #{ms_image_dis_council_forward.1} parent=11 // pred_fallthru
        _
      // Predicated region
      $region45: #{ms_image_dis_council_forward.1} parent=11 // pred_check
        %p450 = pneg %p238
      $region46: #{ms_image_dis_council_forward.1} parent=11 // pred_check_branch
        %452 = sbr.rel (%p450) target = $region48
      $region47: #{ms_image_dis_council_forward.1} parent=11 // pred_region
        _
      $region48: #{ms_image_dis_council_forward.1} parent=11 // pred_fallthru
        _
      // Predicated region
      $region49: #{ms_image_dis_council_forward.1} parent=11 // pred_check
        %p453 = pneg %p259
      $region50: #{ms_image_dis_council_forward.1} parent=11 // pred_check_branch
        %455 = sbr.rel (%p453) target = $region52
      $region51: #{ms_image_dis_council_forward.1} parent=11 // pred_region
        _
      $region52: #{ms_image_dis_council_forward.1} parent=11 // pred_fallthru
        _
      // Predicated region
      $region53: #{ms_image_dis_council_forward.1} parent=11 // pred_check
        %p456 = pneg %p280
      $region54: #{ms_image_dis_council_forward.1} parent=11 // pred_check_branch
        %458 = sbr.rel (%p456) target = $region56
      $region55: #{ms_image_dis_council_forward.1} parent=11 // pred_region
        _
      $region56: #{ms_image_dis_council_forward.1} parent=11 // pred_fallthru
        _
      // Predicated region
      $region57: #{ms_image_dis_council_forward.1} parent=11 // pred_check
        %p459 = pneg %p301
      $region58: #{ms_image_dis_council_forward.1} parent=11 // pred_check_branch
        %461 = sbr.rel (%p459) target = $region60
      $region59: #{ms_image_dis_council_forward.1} parent=11 // pred_region
        _
      $region60: #{ms_image_dis_council_forward.1} parent=11 // pred_fallthru
        _
      // Predicated region
      $region61: #{ms_image_dis_council_forward.1} parent=11 // pred_check
        %p462 = pneg %p322
      $region62: #{ms_image_dis_council_forward.1} parent=11 // pred_check_branch
        %464 = sbr.rel (%p462) target = $region64
      $region63: #{ms_image_dis_council_forward.1} parent=11 // pred_region
        _
      $region64: #{ms_image_dis_council_forward.1} parent=11 // pred_fallthru
        _
      // Predicated region
      $region65: #{ms_image_dis_council_forward.1} parent=11 // pred_check
        %p465 = pneg %p343
      $region66: #{ms_image_dis_council_forward.1} parent=11 // pred_check_branch
        %467 = sbr.rel (%p465) target = $region68
      $region67: #{ms_image_dis_council_forward.1} parent=11 // pred_region
        _
      $region68: #{ms_image_dis_council_forward.1} parent=11 // pred_fallthru
        _
      // Predicated region
      $region69: #{ms_image_dis_council_forward.1} parent=11 // pred_check
        %p468 = pneg %p364
      $region70: #{ms_image_dis_council_forward.1} parent=11 // pred_check_branch
        %470 = sbr.rel (%p468) target = $region72
      $region71: #{ms_image_dis_council_forward.1} parent=11 // pred_region
        _
      $region72: #{ms_image_dis_council_forward.1} parent=11 // pred_fallthru
        _
      // Predicated region
      $region73: #{ms_image_dis_council_forward.1} parent=11 // pred_check
        %p471 = pneg %p385
      $region74: #{ms_image_dis_council_forward.1} parent=11 // pred_check_branch
        %473 = sbr.rel (%p471) target = $region76
      $region75: #{ms_image_dis_council_forward.1} parent=11 // pred_region
        _
      $region76: #{ms_image_dis_council_forward.1} parent=11 // pred_fallthru
        _
    $region12: #{ms_image_dis_council_forward.1} parent=5 // pred_fallthru
      _
    %p474 = scmp.lt.s32.totalorder %s23, 2
    // Predicated region
    $region77: #{ms_image_dis_council_forward.1} parent=5 // pred_check
      %p475 = pneg %p474
    $region78: #{ms_image_dis_council_forward.1} parent=5 // pred_check_branch
      %477 = sbr.rel (%p475) target = $region80
    $region79: #{ms_image_dis_council_forward.1} parent=5 // pred_region
      // Predicated region
      $region81: #{ms_image_dis_council_forward.1} parent=79 // pred_check
        %p478 = pneg %p43
      $region82: #{ms_image_dis_council_forward.1} parent=79 // pred_check_branch
        %480 = sbr.rel (%p478) target = $region84
      $region83: #{ms_image_dis_council_forward.1} parent=79 // pred_region
        %p481 = scmp.lt.s32.totalorder %s23, 1
        %s482 = scalar_select %p481, %s23, 1
        %s483 = smul.addr %s482, 3
        %s484 = smul.addr %s483, 8
        %s485 = scalar_lea.vmem %s0, %s484
      $region84: #{ms_image_dis_council_forward.1} parent=79 // pred_fallthru
        _
    $region80: #{ms_image_dis_council_forward.1} parent=5 // pred_fallthru
      _
    %p486 = scmp.le.s32.totalorder 1, %s23
    %p487 = scmp.lt.s32.totalorder %s23, 3
    %p488 = pnand %p486, %p487
    %p489 = pneg %p488
    // Predicated region
    $region85: #{ms_image_dis_council_forward.1} parent=5 // pred_check
      _
    $region86: #{ms_image_dis_council_forward.1} parent=5 // pred_check_branch
      %491 = sbr.rel (%p488) target = $region88
    $region87: #{ms_image_dis_council_forward.1} parent=5 // pred_region
      %s492 = ssub.s32 %s23, 1
      %p493 = scmp.lt.s32.totalorder %s28, 1
      %s494 = scalar_select %p493, %s28, 1
      %s495 = smul.addr %s494, 3
      %s496 = smul.addr %s495, 8
      %s497 = scalar_lea.vmem %s0, %s496
      %p498 = pneg %p49
      %p499 = pneg %p46
      %p500 = pneg %p70
      %p501 = pneg %p67
      %p502 = pneg %p91
      %p503 = pneg %p88
      %p504 = pneg %p112
      %p505 = pneg %p109
      %p506 = pneg %p133
      %p507 = pneg %p130
      %p508 = pneg %p154
      %p509 = pneg %p151
      %p510 = pneg %p175
      %p511 = pneg %p172
      %p512 = pneg %p196
      %p513 = pneg %p193
      %p514 = pneg %p217
      %p515 = pneg %p214
      %p516 = pneg %p238
      %p517 = pneg %p235
      %p518 = pneg %p259
      %p519 = pneg %p256
      %p520 = pneg %p280
      %p521 = pneg %p277
      %p522 = pneg %p301
      %p523 = pneg %p298
      %p524 = pneg %p322
      %p525 = pneg %p319
      %p526 = pneg %p343
      %p527 = pneg %p340
      %p528 = pneg %p364
      %p529 = pneg %p361
      %p530 = pneg %p385
      %p531 = pneg %p382
      %p532 = pneg %p411
      %p533 = pneg %p408
      %p534 = scmp.lt.s32.totalorder %s28, 1
      %s535 = scalar_select %p534, %s28, 1
      %s536 = scalar_lea.vmem %s17, %s535
      %p537 = scmp.lt.s32.totalorder %s28, 1
      %s538 = scalar_select %p537, %s28, 1
      %s539 = smul.addr %s538, 3
      %s540 = smul.addr %s539, 8
      %s541 = scalar_lea.vmem %s0, %s540
      %p542 = scmp.lt.s32.totalorder %s28, 1
      %s543 = scalar_select %p542, %s28, 1
      %s544 = scalar_lea.vmem %s17, %s543
      %v546 = vld [vmem:[%s541] sm:$0xff]
      %v547 = vld [vmem:[%s541 + $0x8] sm:$0xff]
      %v548 = vld [vmem:[%s541 + $0x10] sm:$0xff]
      %v549 = vld [vmem:[%s1] sm:$0x7]
      %v550 = vld [vmem:[%s3] sm:$0xff]
      %v551 = vld [vmem:[%s3 + $0x8] sm:$0xff]
      %v552 = vld [vmem:[%s3 + $0x10] sm:$0xff]
      %v553 = vld [vmem:[%s3 + $0x18] sm:$0xff]
      %v554 = vld [vmem:[%s3 + $0x20] sm:$0xff]
      %v555 = vld [vmem:[%s3 + $0x28] sm:$0xff]
      %v556 = vld [vmem:[%s3 + $0x30] sm:$0xff]
      %v557 = vld [vmem:[%s3 + $0x38] sm:$0xff]
      %v558 = vld [vmem:[%s3 + $0x40] sm:$0xff]
      %v559 = vld [vmem:[%s3 + $0x48] sm:$0xff]
      %v560 = vld [vmem:[%s3 + $0x50] sm:$0xff]
      %v561 = vld [vmem:[%s3 + $0x58] sm:$0xff]
      %v562 = vld [vmem:[%s3 + $0x60] sm:$0xff]
      %v563 = vld [vmem:[%s3 + $0x68] sm:$0xff]
      %v564 = vld [vmem:[%s3 + $0x70] sm:$0xff]
      %v565 = vld [vmem:[%s3 + $0x78] sm:$0xff]
      %v566 = vld [vmem:[%s3 + $0x80] sm:$0xff]
      %v567 = vld [vmem:[%s3 + $0x88] sm:$0xff]
      %v568 = vld [vmem:[%s3 + $0x90] sm:$0xff]
      %v569 = vld [vmem:[%s3 + $0x98] sm:$0xff]
      %v570 = vld [vmem:[%s3 + $0xa0] sm:$0xff]
      %v571 = vld [vmem:[%s3 + $0xa8] sm:$0xff]
      %v572 = vld [vmem:[%s3 + $0xb0] sm:$0xff]
      %v573 = vld [vmem:[%s3 + $0xb8] sm:$0xff]
      %v574 = vld [vmem:[%s3 + $0xc0] sm:$0xff]
      %v575 = vld [vmem:[%s3 + $0xc8] sm:$0xff]
      %v576 = vld [vmem:[%s3 + $0xd0] sm:$0xff]
      %v577 = vld [vmem:[%s3 + $0xd8] sm:$0xff]
      %v578 = vld [vmem:[%s3 + $0xe0] sm:$0xff]
      %v579 = vld [vmem:[%s3 + $0xe8] sm:$0xff]
      %v580 = vld [vmem:[%s3 + $0xf0] sm:$0xff]
      %v581 = vld [vmem:[%s3 + $0xf8] sm:$0xff]
      %v582 = vld [vmem:[%s3 + $0x100] sm:$0xff]
      %v583 = vld [vmem:[%s3 + $0x108] sm:$0xff]
      %v584 = vld [vmem:[%s3 + $0x110] sm:$0xff]
      %v585 = vld [vmem:[%s3 + $0x118] sm:$0xff]
      %v586 = vld [vmem:[%s3 + $0x120] sm:$0xff]
      %v587 = vld [vmem:[%s3 + $0x128] sm:$0xff]
      %v588 = vld [vmem:[%s3 + $0x130] sm:$0xff]
      %v589 = vld [vmem:[%s3 + $0x138] sm:$0xff]
      %v590 = vld [vmem:[%s3 + $0x140] sm:$0xff]
      %v591 = vld [vmem:[%s3 + $0x148] sm:$0xff]
      %v592 = vld [vmem:[%s3 + $0x150] sm:$0xff]
      %v593 = vld [vmem:[%s3 + $0x158] sm:$0xff]
      %v594 = vld [vmem:[%s3 + $0x160] sm:$0xff]
      %v595 = vld [vmem:[%s3 + $0x168] sm:$0xff]
      %v596 = vld [vmem:[%s3 + $0x170] sm:$0xff]
      %v597 = vld [vmem:[%s3 + $0x178] sm:$0xff]
      %v598 = vld [vmem:[%s7] sm:$0xff]
      %v599 = vld [vmem:[%s8] sm:$0xff]
      %v600 = vld [vmem:[%s9] sm:$0xff]
      %v601 = vld [vmem:[%s9 + $0x8] sm:$0xff]
      %v602 = vld [vmem:[%s10] sm:$0xff]
      %v603 = vld [vmem:[%s10 + $0x8] sm:$0xff]
      %v604 = vld [vmem:[%s11] sm:$0xff]
      %v605 = vld [vmem:[%s11 + $0x8] sm:$0xff]
      %609 = vrot.lane.b32.xlu0 %v546, 19
      %v610 = vpop.permute.xlu0 %609
      %611 = vrot.lane.b32.xlu0 %v547, 19
      %v612 = vpop.permute.xlu0 %611
      %613 = vrot.lane.b32.xlu0 %v548, 19
      %v614 = vpop.permute.xlu0 %613
      %vm615 = vcmask 154624
      %v616 = vsel %vm615, %v610, %v612
      %v617 = vsel %vm615, %v612, %v614
      %v621 = vsel %vm615, 0.0, %v610
      %622 = vrot.lane.b32.xlu0 %v546, 18
      %v623 = vpop.permute.xlu0 %622
      %624 = vrot.lane.b32.xlu0 %v547, 18
      %v625 = vpop.permute.xlu0 %624
      %626 = vrot.lane.b32.xlu0 %v548, 18
      %v627 = vpop.permute.xlu0 %626
      %vm628 = vcmask 146432
      %v629 = vsel %vm628, %v623, %v625
      %v630 = vsel %vm628, %v625, %v627
      %v634 = vsel %vm628, 0.0, %v623
      %635 = vrot.lane.b32.xlu0 %v546, 17
      %v636 = vpop.permute.xlu0 %635
      %637 = vrot.lane.b32.xlu0 %v547, 17
      %v638 = vpop.permute.xlu0 %637
      %639 = vrot.lane.b32.xlu0 %v548, 17
      %v640 = vpop.permute.xlu0 %639
      %vm641 = vcmask 138240
      %v642 = vsel %vm641, %v636, %v638
      %v643 = vsel %vm641, %v638, %v640
      %v647 = vsel %vm641, 0.0, %v636
      %648 = vrot.lane.b32.xlu0 %v546, 1
      %v649 = vpop.permute.xlu0 %648
      %650 = vrot.lane.b32.xlu0 %v547, 1
      %v651 = vpop.permute.xlu0 %650
      %652 = vrot.lane.b32.xlu0 %v548, 1
      %v653 = vpop.permute.xlu0 %652
      %vm654 = vcmask 7168
      %v655 = vsel %vm654, %v649, %v651
      %v656 = vsel %vm654, %v651, %v653
      %v660 = vsel %vm654, 0.0, %v649
      %661 = vrot.lane.b32.xlu0 %v546, 127
      %v662 = vpop.permute.xlu0 %661
      %663 = vrot.lane.b32.xlu0 %v547, 127
      %v664 = vpop.permute.xlu0 %663
      %665 = vrot.lane.b32.xlu0 %v548, 127
      %v666 = vpop.permute.xlu0 %665
      %vm667 = vcmask 1039360
      %v668 = vsel %vm667, %v662, %v664
      %v669 = vsel %vm667, %v664, %v666
      %v673 = vsel %vm667, %v666, 0.0
      %674 = vrot.lane.b32.xlu0 %v546, 111
      %v675 = vpop.permute.xlu0 %674
      %676 = vrot.lane.b32.xlu0 %v547, 111
      %v677 = vpop.permute.xlu0 %676
      %678 = vrot.lane.b32.xlu0 %v548, 111
      %v679 = vpop.permute.xlu0 %678
      %vm680 = vcmask 908288
      %v681 = vsel %vm680, %v675, %v677
      %v682 = vsel %vm680, %v677, %v679
      %v686 = vsel %vm680, %v679, 0.0
      %687 = vrot.lane.b32.xlu0 %v546, 110
      %v688 = vpop.permute.xlu0 %687
      %689 = vrot.lane.b32.xlu0 %v547, 110
      %v690 = vpop.permute.xlu0 %689
      %691 = vrot.lane.b32.xlu0 %v548, 110
      %v692 = vpop.permute.xlu0 %691
      %vm693 = vcmask 900096
      %v694 = vsel %vm693, %v688, %v690
      %v695 = vsel %vm693, %v690, %v692
      %v699 = vsel %vm693, %v692, 0.0
      %700 = vrot.lane.b32.xlu0 %v546, 109
      %v701 = vpop.permute.xlu0 %700
      %702 = vrot.lane.b32.xlu0 %v547, 109
      %v703 = vpop.permute.xlu0 %702
      %704 = vrot.lane.b32.xlu0 %v548, 109
      %v705 = vpop.permute.xlu0 %704
      %vm706 = vcmask 891904
      %v707 = vsel %vm706, %v701, %v703
      %v708 = vsel %vm706, %v703, %v705
      %v712 = vsel %vm706, %v705, 0.0
      %v713 = vadd.f32 %v621, %v634
      %v714 = vadd.f32 %v616, %v629
      %v715 = vadd.f32 %v617, %v630
      %v716 = vadd.f32 %v713, %v647
      %v717 = vadd.f32 %v714, %v642
      %v718 = vadd.f32 %v715, %v643
      %v719 = vadd.f32 %v716, %v660
      %v720 = vadd.f32 %v717, %v655
      %v721 = vadd.f32 %v718, %v656
      %v722 = vadd.f32 %v719, %v546
      %v723 = vadd.f32 %v720, %v547
      %v724 = vadd.f32 %v721, %v548
      %v725 = vadd.f32 %v722, %v668
      %v726 = vadd.f32 %v723, %v669
      %v727 = vadd.f32 %v724, %v673
      %v728 = vadd.f32 %v725, %v681
      %v729 = vadd.f32 %v726, %v682
      %v730 = vadd.f32 %v727, %v686
      %v731 = vadd.f32 %v728, %v694
      %v732 = vadd.f32 %v729, %v695
      %v733 = vadd.f32 %v730, %v699
      %v734 = vadd.f32 %v731, %v707
      %v735 = vadd.f32 %v732, %v708
      %v736 = vadd.f32 %v733, %v712
      %v737 = vpack.c.bf16 %v598, %v598
      %v738 = vpack.c.bf16 %v634, %v621
      %v739 = vpack.c.bf16 %v629, %v616
      %v740 = vpack.c.bf16 %v630, %v617
      %v741 = vpack.c.bf16 %v660, %v647
      %v742 = vpack.c.bf16 %v655, %v642
      %v743 = vpack.c.bf16 %v656, %v643
      %v744 = vpack.c.bf16 %v668, %v546
      %v745 = vpack.c.bf16 %v669, %v547
      %v746 = vpack.c.bf16 %v673, %v548
      %v747 = vpack.c.bf16 %v694, %v681
      %v748 = vpack.c.bf16 %v695, %v682
      %v749 = vpack.c.bf16 %v699, %v686
      %v750 = vpack.c.bf16 %v707, %v707
      %v751 = vpack.c.bf16 %v708, %v708
      %v752 = vpack.c.bf16 %v712, %v712
      %754 = vset.pattern.permute.xlu0 0
      %755 = vperm.xlu0 %754, %v599
      %v756 = vpop.permute.xlu0 %755
      %vm758 = vcmask 588800
      %v760 = vsel %vm758, %v737, 0
      %vm762 = vcmask 1043456
      %v764 = vsel %vm762, %v750, 0
      %v767 = vsel %vm762, %v751, 0
      %v770 = vsel %vm762, %v752, 0
      %772 = vmatprep.subr.bf16.mxu0 %v739
      %773 = vmatpush1.bf16.msra.mxu0 %v738
      %774 = vmatprep.subr.bf16.mxu0 %v742
      %775 = vmatpush1.bf16.msra.mxu0 %v741
      %776 = vmatprep.subr.bf16.mxu0 %v745
      %777 = vmatpush1.bf16.msra.mxu0 %v744
      %778 = vmatprep.subr.bf16.mxu0 %v748
      %779 = vmatpush1.bf16.msra.mxu0 %v747
      %780 = vmatprep.subr.bf16.mxu0 %v767
      %781 = vmatpush1.bf16.msra.mxu0 %v764
      %782 = vmatprep.subr.bf16.mxu0 0
      %783 = vmatpush1.bf16.msra.mxu0 0
      %784 = vmatprep.subr.bf16.mxu0 0
      %785 = vmatpush1.bf16.msra.mxu0 0
      %786 = vmatprep.subr.bf16.mxu0 0
      %787 = vmatpush1.bf16.msra.mxu0 0
      %788 = vmatprep.subr.bf16.mxu0 0
      %789 = vmatpush1.bf16.msra.mxu0 0
      %790 = vmatprep.subr.bf16.mxu0 0
      %791 = vmatpush1.bf16.msra.mxu0 0
      %792 = vmatprep.subr.bf16.mxu0 0
      %793 = vmatpush1.bf16.msra.mxu0 0
      %794 = vmatprep.subr.bf16.mxu0 0
      %795 = vmatpush1.bf16.msra.mxu0 0
      %796 = vmatprep.subr.bf16.mxu0 0
      %797 = vmatpush1.bf16.msra.mxu0 0
      %798 = vmatprep.subr.bf16.mxu0 0
      %799 = vmatpush1.bf16.msra.mxu0 0
      %800 = vmatprep.subr.bf16.mxu0 0
      %801 = vmatpush1.bf16.msra.mxu0 0
      %802 = vmatprep.subr.bf16.mxu0 0
      %803 = vmatpush1.bf16.msra.mxu0 0
      %804 = vmatprep.mubr.bf16.mxu0 0
      %805 = vmatmul.mubr.bf16.gmra.mrb[0].mxu0 %v760
      %v806 = vpop.f32.mrb[0].mxu0
      %v807 = vadd.f32 %v756, %v806
      %v808 = vpop.f32.mrb[0].mxu0
      %v809 = vadd.f32 %v756, %v808
      %v810 = vpop.f32.mrb[0].mxu0
      %v811 = vpop.f32.mrb[0].mxu0
      %812 = vdwg.mxu0
      %813 = vmatprep.subr.bf16.mxu0 0
      %814 = vmatpush1.bf16.msra.mxu0 %v740
      %815 = vmatprep.subr.bf16.mxu0 0
      %816 = vmatpush1.bf16.msra.mxu0 %v743
      %817 = vmatprep.subr.bf16.mxu0 0
      %818 = vmatpush1.bf16.msra.mxu0 %v746
      %819 = vmatprep.subr.bf16.mxu0 0
      %820 = vmatpush1.bf16.msra.mxu0 %v749
      %821 = vmatprep.subr.bf16.mxu0 0
      %822 = vmatpush1.bf16.msra.mxu0 %v770
      %823 = vmatprep.subr.bf16.mxu0 0
      %824 = vmatpush1.bf16.msra.mxu0 0
      %825 = vmatprep.subr.bf16.mxu0 0
      %826 = vmatpush1.bf16.msra.mxu0 0
      %827 = vmatprep.subr.bf16.mxu0 0
      %828 = vmatpush1.bf16.msra.mxu0 0
      %829 = vmatprep.subr.bf16.mxu0 0
      %830 = vmatpush1.bf16.msra.mxu0 0
      %831 = vmatprep.subr.bf16.mxu0 0
      %832 = vmatpush1.bf16.msra.mxu0 0
      %833 = vmatprep.subr.bf16.mxu0 0
      %834 = vmatpush1.bf16.msra.mxu0 0
      %835 = vmatprep.subr.bf16.mxu0 0
      %836 = vmatpush1.bf16.msra.mxu0 0
      %837 = vmatprep.subr.bf16.mxu0 0
      %838 = vmatpush1.bf16.msra.mxu0 0
      %839 = vmatprep.subr.bf16.mxu0 0
      %840 = vmatpush1.bf16.msra.mxu0 0
      %841 = vmatprep.subr.bf16.mxu0 0
      %842 = vmatpush1.bf16.msra.mxu0 0
      %843 = vmatprep.subr.bf16.mxu0 0
      %844 = vmatpush1.bf16.msra.mxu0 0
      %845 = vmatprep.mubr.bf16.mxu0 0
      %846 = vmatmul.mubr.bf16.gmra.mrb[0].mxu0 %v760
      %v847 = vpop.f32.mrb[0].mxu0
      %v848 = vadd.f32 %v756, %v847
      %v849 = vpop.f32.mrb[0].mxu0
      %v850 = vpop.f32.mrb[0].mxu0
      %v851 = vpop.f32.mrb[0].mxu0
      %852 = vdwg.mxu0
      %vm853 = vcmp.gt.f32.partialorder %v807, 0.0
      %vm854 = vcmp.gt.f32.partialorder %v809, 0.0
      %vm855 = vcmp.gt.f32.partialorder %v848, 0.0
      %v856 = vmul.f32 %v807, 0.2
      %v857 = vmul.f32 %v809, 0.2
      %v858 = vmul.f32 %v848, 0.2
      %v859 = vsel %vm853, %v807, %v856
      %v860 = vsel %vm854, %v809, %v857
      %v861 = vsel %vm855, %v848, %v858
      %v863 = vlaneseq
      %v864 = vshrl.u32 %v863, 7
      %v865 = vsub.s32 0, %v864
      %v866 = vrot.slane %v549, %v865
      %v867 = vlaneseq
      %v868 = vshrl.u32 %v867, 7
      %v869 = vsub.s32 1, %v868
      %v870 = vrot.slane %v549, %v869
      %v871 = vlaneseq
      %v872 = vshrl.u32 %v871, 7
      %v873 = vsub.s32 2, %v872
      %v874 = vrot.slane %v549, %v873
      %v878 = vmul.f32 %v859, %v866
      %v879 = vmul.f32 %v860, %v870
      %v880 = vmul.f32 %v861, %v874
      %884 = vrot.lane.b32.xlu0 %v878, 127
      %v885 = vpop.permute.xlu0 %884
      %886 = vrot.lane.b32.xlu0 %v879, 127
      %v887 = vpop.permute.xlu0 %886
      %888 = vrot.lane.b32.xlu0 %v880, 127
      %v889 = vpop.permute.xlu0 %888
      %v890 = vsel %vm667, %v885, %v887
      %v891 = vsel %vm667, %v887, %v889
      %v895 = vsel %vm667, %v889, 0.0
      %896 = vrot.lane.b32.xlu0 %v878, 126
      %v897 = vpop.permute.xlu0 %896
      %898 = vrot.lane.b32.xlu0 %v879, 126
      %v899 = vpop.permute.xlu0 %898
      %900 = vrot.lane.b32.xlu0 %v880, 126
      %v901 = vpop.permute.xlu0 %900
      %vm902 = vcmask 1031168
      %v903 = vsel %vm902, %v897, %v899
      %v904 = vsel %vm902, %v899, %v901
      %v908 = vsel %vm902, %v901, 0.0
      %909 = vrot.lane.b32.xlu0 %v878, 125
      %v910 = vpop.permute.xlu0 %909
      %911 = vrot.lane.b32.xlu0 %v879, 125
      %v912 = vpop.permute.xlu0 %911
      %913 = vrot.lane.b32.xlu0 %v880, 125
      %v914 = vpop.permute.xlu0 %913
      %vm915 = vcmask 1022976
      %v916 = vsel %vm915, %v910, %v912
      %v917 = vsel %vm915, %v912, %v914
      %v921 = vsel %vm915, %v914, 0.0
      %922 = vrot.lane.b32.xlu0 %v878, 110
      %v923 = vpop.permute.xlu0 %922
      %924 = vrot.lane.b32.xlu0 %v879, 110
      %v925 = vpop.permute.xlu0 %924
      %926 = vrot.lane.b32.xlu0 %v880, 110
      %v927 = vpop.permute.xlu0 %926
      %v928 = vsel %vm693, %v923, %v925
      %v929 = vsel %vm693, %v925, %v927
      %v933 = vsel %vm693, %v927, 0.0
      %934 = vrot.lane.b32.xlu0 %v878, 109
      %v935 = vpop.permute.xlu0 %934
      %936 = vrot.lane.b32.xlu0 %v879, 109
      %v937 = vpop.permute.xlu0 %936
      %938 = vrot.lane.b32.xlu0 %v880, 109
      %v939 = vpop.permute.xlu0 %938
      %v940 = vsel %vm706, %v935, %v937
      %v941 = vsel %vm706, %v937, %v939
      %v945 = vsel %vm706, %v939, 0.0
      %946 = vrot.lane.b32.xlu0 %v878, 108
      %v947 = vpop.permute.xlu0 %946
      %948 = vrot.lane.b32.xlu0 %v879, 108
      %v949 = vpop.permute.xlu0 %948
      %950 = vrot.lane.b32.xlu0 %v880, 108
      %v951 = vpop.permute.xlu0 %950
      %vm952 = vcmask 883712
      %v953 = vsel %vm952, %v947, %v949
      %v954 = vsel %vm952, %v949, %v951
      %v958 = vsel %vm952, %v951, 0.0
      %959 = vrot.lane.b32.xlu0 %v878, 107
      %v960 = vpop.permute.xlu0 %959
      %961 = vrot.lane.b32.xlu0 %v879, 107
      %v962 = vpop.permute.xlu0 %961
      %963 = vrot.lane.b32.xlu0 %v880, 107
      %v964 = vpop.permute.xlu0 %963
      %vm965 = vcmask 875520
      %v966 = vsel %vm965, %v960, %v962
      %v967 = vsel %vm965, %v962, %v964
      %v971 = vsel %vm965, %v964, 0.0
      %972 = vrot.lane.b32.xlu0 %v878, 92
      %v973 = vpop.permute.xlu0 %972
      %974 = vrot.lane.b32.xlu0 %v879, 92
      %v975 = vpop.permute.xlu0 %974
      %976 = vrot.lane.b32.xlu0 %v880, 92
      %v977 = vpop.permute.xlu0 %976
      %vm978 = vcmask 752640
      %v979 = vsel %vm978, %v973, %v975
      %v980 = vsel %vm978, %v975, %v977
      %v984 = vsel %vm978, %v977, 0.0
      %985 = vrot.lane.b32.xlu0 %v878, 91
      %v986 = vpop.permute.xlu0 %985
      %987 = vrot.lane.b32.xlu0 %v879, 91
      %v988 = vpop.permute.xlu0 %987
      %989 = vrot.lane.b32.xlu0 %v880, 91
      %v990 = vpop.permute.xlu0 %989
      %vm991 = vcmask 744448
      %v992 = vsel %vm991, %v986, %v988
      %v993 = vsel %vm991, %v988, %v990
      %v997 = vsel %vm991, %v990, 0.0
      %998 = vrot.lane.b32.xlu0 %v878, 90
      %v999 = vpop.permute.xlu0 %998
      %1000 = vrot.lane.b32.xlu0 %v879, 90
      %v1001 = vpop.permute.xlu0 %1000
      %1002 = vrot.lane.b32.xlu0 %v880, 90
      %v1003 = vpop.permute.xlu0 %1002
      %vm1004 = vcmask 736256
      %v1005 = vsel %vm1004, %v999, %v1001
      %v1006 = vsel %vm1004, %v1001, %v1003
      %v1010 = vsel %vm1004, %v1003, 0.0
      %1011 = vrot.lane.b32.xlu0 %v878, 89
      %v1012 = vpop.permute.xlu0 %1011
      %1013 = vrot.lane.b32.xlu0 %v879, 89
      %v1014 = vpop.permute.xlu0 %1013
      %1015 = vrot.lane.b32.xlu0 %v880, 89
      %v1016 = vpop.permute.xlu0 %1015
      %vm1017 = vcmask 728064
      %v1018 = vsel %vm1017, %v1012, %v1014
      %v1019 = vsel %vm1017, %v1014, %v1016
      %v1023 = vsel %vm1017, %v1016, 0.0
      %1024 = vrot.lane.b32.xlu0 %v878, 74
      %v1025 = vpop.permute.xlu0 %1024
      %1026 = vrot.lane.b32.xlu0 %v879, 74
      %v1027 = vpop.permute.xlu0 %1026
      %1028 = vrot.lane.b32.xlu0 %v880, 74
      %v1029 = vpop.permute.xlu0 %1028
      %vm1030 = vcmask 605184
      %v1031 = vsel %vm1030, %v1025, %v1027
      %v1032 = vsel %vm1030, %v1027, %v1029
      %v1036 = vsel %vm1030, %v1029, 0.0
      %1037 = vrot.lane.b32.xlu0 %v878, 73
      %v1038 = vpop.permute.xlu0 %1037
      %1039 = vrot.lane.b32.xlu0 %v879, 73
      %v1040 = vpop.permute.xlu0 %1039
      %1041 = vrot.lane.b32.xlu0 %v880, 73
      %v1042 = vpop.permute.xlu0 %1041
      %vm1043 = vcmask 596992
      %v1044 = vsel %vm1043, %v1038, %v1040
      %v1045 = vsel %vm1043, %v1040, %v1042
      %v1049 = vsel %vm1043, %v1042, 0.0
      %1050 = vrot.lane.b32.xlu0 %v878, 72
      %v1051 = vpop.permute.xlu0 %1050
      %1052 = vrot.lane.b32.xlu0 %v879, 72
      %v1053 = vpop.permute.xlu0 %1052
      %1054 = vrot.lane.b32.xlu0 %v880, 72
      %v1055 = vpop.permute.xlu0 %1054
      %v1056 = vsel %vm758, %v1051, %v1053
      %v1057 = vsel %vm758, %v1053, %v1055
      %v1061 = vsel %vm758, %v1055, 0.0
      %1062 = vrot.lane.b32.xlu0 %v878, 71
      %v1063 = vpop.permute.xlu0 %1062
      %1064 = vrot.lane.b32.xlu0 %v879, 71
      %v1065 = vpop.permute.xlu0 %1064
      %1066 = vrot.lane.b32.xlu0 %v880, 71
      %v1067 = vpop.permute.xlu0 %1066
      %vm1068 = vcmask 580608
      %v1069 = vsel %vm1068, %v1063, %v1065
      %v1070 = vsel %vm1068, %v1065, %v1067
      %v1074 = vsel %vm1068, %v1067, 0.0
      %v1075 = vpack.c.bf16 %v601, %v600
      %v1076 = vpack.c.bf16 %v890, %v878
      %v1077 = vpack.c.bf16 %v891, %v879
      %v1078 = vpack.c.bf16 %v895, %v880
      %v1079 = vpack.c.bf16 %v916, %v903
      %v1080 = vpack.c.bf16 %v917, %v904
      %v1081 = vpack.c.bf16 %v921, %v908
      %v1082 = vpack.c.bf16 %v940, %v928
      %v1083 = vpack.c.bf16 %v941, %v929
      %v1084 = vpack.c.bf16 %v945, %v933
      %v1085 = vpack.c.bf16 %v966, %v953
      %v1086 = vpack.c.bf16 %v967, %v954
      %v1087 = vpack.c.bf16 %v971, %v958
      %v1088 = vpack.c.bf16 %v992, %v979
      %v1089 = vpack.c.bf16 %v993, %v980
      %v1090 = vpack.c.bf16 %v997, %v984
      %v1091 = vpack.c.bf16 %v1018, %v1005
      %v1092 = vpack.c.bf16 %v1019, %v1006
      %v1093 = vpack.c.bf16 %v1023, %v1010
      %v1094 = vpack.c.bf16 %v1044, %v1031
      %v1095 = vpack.c.bf16 %v1045, %v1032
      %v1096 = vpack.c.bf16 %v1049, %v1036
      %v1097 = vpack.c.bf16 %v1069, %v1056
      %v1098 = vpack.c.bf16 %v1070, %v1057
      %v1099 = vpack.c.bf16 %v1074, %v1061
      %1101 = vset.pattern.permute.xlu0 0
      %1102 = vperm.xlu0 %1101, %v602
      %v1103 = vpop.permute.xlu0 %1102
      %1106 = vset.pattern.permute.xlu0 0
      %1107 = vperm.xlu0 %1106, %v603
      %v1108 = vpop.permute.xlu0 %1107
      %1110 = vmatprep.subr.bf16.mxu0 %v1077
      %1111 = vmatpush1.bf16.msra.mxu0 %v1076
      %1112 = vmatprep.subr.bf16.mxu0 %v1080
      %1113 = vmatpush1.bf16.msra.mxu0 %v1079
      %1114 = vmatprep.subr.bf16.mxu0 %v1083
      %1115 = vmatpush1.bf16.msra.mxu0 %v1082
      %1116 = vmatprep.subr.bf16.mxu0 %v1086
      %1117 = vmatpush1.bf16.msra.mxu0 %v1085
      %1118 = vmatprep.subr.bf16.mxu0 %v1089
      %1119 = vmatpush1.bf16.msra.mxu0 %v1088
      %1120 = vmatprep.subr.bf16.mxu0 %v1092
      %1121 = vmatpush1.bf16.msra.mxu0 %v1091
      %1122 = vmatprep.subr.bf16.mxu0 %v1095
      %1123 = vmatpush1.bf16.msra.mxu0 %v1094
      %1124 = vmatprep.subr.bf16.mxu0 %v1098
      %1125 = vmatpush1.bf16.msra.mxu0 %v1097
      %1126 = vmatprep.subr.bf16.mxu0 0
      %1127 = vmatpush1.bf16.msra.mxu0 0
      %1128 = vmatprep.subr.bf16.mxu0 0
      %1129 = vmatpush1.bf16.msra.mxu0 0
      %1130 = vmatprep.subr.bf16.mxu0 0
      %1131 = vmatpush1.bf16.msra.mxu0 0
      %1132 = vmatprep.subr.bf16.mxu0 0
      %1133 = vmatpush1.bf16.msra.mxu0 0
      %1134 = vmatprep.subr.bf16.mxu0 0
      %1135 = vmatpush1.bf16.msra.mxu0 0
      %1136 = vmatprep.subr.bf16.mxu0 0
      %1137 = vmatpush1.bf16.msra.mxu0 0
      %1138 = vmatprep.subr.bf16.mxu0 0
      %1139 = vmatpush1.bf16.msra.mxu0 0
      %1140 = vmatprep.subr.bf16.mxu0 0
      %1141 = vmatpush1.bf16.msra.mxu0 0
      %1142 = vmatprep.mubr.bf16.mxu0 0
      %1143 = vmatmul.mubr.bf16.gmra.mrb[0].mxu0 %v1075
      %v1144 = vpop.f32.mrb[0].mxu0
      %v1145 = vadd.f32 %v1103, %v1144
      %v1146 = vpop.f32.mrb[0].mxu0
      %v1147 = vadd.f32 %v1103, %v1146
      %v1148 = vpop.f32.mrb[0].mxu0
      %v1149 = vadd.f32 %v1108, %v1148
      %v1150 = vpop.f32.mrb[0].mxu0
      %v1151 = vadd.f32 %v1108, %v1150
      %1152 = vdwg.mxu0
      %1153 = vmatprep.subr.bf16.mxu0 0
      %1154 = vmatpush1.bf16.msra.mxu0 %v1078
      %1155 = vmatprep.subr.bf16.mxu0 0
      %1156 = vmatpush1.bf16.msra.mxu0 %v1081
      %1157 = vmatprep.subr.bf16.mxu0 0
      %1158 = vmatpush1.bf16.msra.mxu0 %v1084
      %1159 = vmatprep.subr.bf16.mxu0 0
      %1160 = vmatpush1.bf16.msra.mxu0 %v1087
      %1161 = vmatprep.subr.bf16.mxu0 0
      %1162 = vmatpush1.bf16.msra.mxu0 %v1090
      %1163 = vmatprep.subr.bf16.mxu0 0
      %1164 = vmatpush1.bf16.msra.mxu0 %v1093
      %1165 = vmatprep.subr.bf16.mxu0 0
      %1166 = vmatpush1.bf16.msra.mxu0 %v1096
      %1167 = vmatprep.subr.bf16.mxu0 0
      %1168 = vmatpush1.bf16.msra.mxu0 %v1099
      %1169 = vmatprep.subr.bf16.mxu0 0
      %1170 = vmatpush1.bf16.msra.mxu0 0
      %1171 = vmatprep.subr.bf16.mxu0 0
      %1172 = vmatpush1.bf16.msra.mxu0 0
      %1173 = vmatprep.subr.bf16.mxu0 0
      %1174 = vmatpush1.bf16.msra.mxu0 0
      %1175 = vmatprep.subr.bf16.mxu0 0
      %1176 = vmatpush1.bf16.msra.mxu0 0
      %1177 = vmatprep.subr.bf16.mxu0 0
      %1178 = vmatpush1.bf16.msra.mxu0 0
      %1179 = vmatprep.subr.bf16.mxu0 0
      %1180 = vmatpush1.bf16.msra.mxu0 0
      %1181 = vmatprep.subr.bf16.mxu0 0
      %1182 = vmatpush1.bf16.msra.mxu0 0
      %1183 = vmatprep.subr.bf16.mxu0 0
      %1184 = vmatpush1.bf16.msra.mxu0 0
      %1185 = vmatprep.mubr.bf16.mxu0 0
      %1186 = vmatmul.mubr.bf16.gmra.mrb[0].mxu0 %v1075
      %v1187 = vpop.f32.mrb[0].mxu0
      %v1188 = vadd.f32 %v1103, %v1187
      %v1189 = vpop.f32.mrb[0].mxu0
      %v1190 = vpop.f32.mrb[0].mxu0
      %v1191 = vadd.f32 %v1108, %v1190
      %v1192 = vpop.f32.mrb[0].mxu0
      %1193 = vdwg.mxu0
      %vm1194 = vcmp.gt.f32.partialorder %v1145, 0.0
      %vm1195 = vcmp.gt.f32.partialorder %v1147, 0.0
      %vm1196 = vcmp.gt.f32.partialorder %v1188, 0.0
      %vm1197 = vcmp.gt.f32.partialorder %v1149, 0.0
      %vm1198 = vcmp.gt.f32.partialorder %v1151, 0.0
      %vm1199 = vcmp.gt.f32.partialorder %v1191, 0.0
      %v1200 = vmul.f32 %v1145, 0.2
      %v1201 = vmul.f32 %v1147, 0.2
      %v1202 = vmul.f32 %v1188, 0.2
      %v1203 = vmul.f32 %v1149, 0.2
      %v1204 = vmul.f32 %v1151, 0.2
      %v1205 = vmul.f32 %v1191, 0.2
      %v1206 = vsel %vm1194, %v1145, %v1200
      %v1207 = vsel %vm1195, %v1147, %v1201
      %v1208 = vsel %vm1196, %v1188, %v1202
      %v1209 = vsel %vm1197, %v1149, %v1203
      %v1210 = vsel %vm1198, %v1151, %v1204
      %v1211 = vsel %vm1199, %v1191, %v1205
      %1212 = vmatprep.subr.mxu0 0.0
      %1213 = vmatpush1.msra.mxu0 %v550
      %1214 = vmatprep.subr.mxu0 0.0
      %1215 = vmatpush1.msra.mxu0 %v551
      %1216 = vmatprep.subr.mxu0 0.0
      %1217 = vmatpush1.msra.mxu0 %v552
      %1218 = vmatprep.subr.mxu0 0.0
      %1219 = vmatpush1.msra.mxu0 %v553
      %1220 = vmatprep.subr.mxu0 0.0
      %1221 = vmatpush1.msra.mxu0 %v554
      %1222 = vmatprep.subr.mxu0 0.0
      %1223 = vmatpush1.msra.mxu0 %v555
      %1224 = vmatprep.subr.mxu0 0.0
      %1225 = vmatpush1.msra.mxu0 %v556
      %1226 = vmatprep.subr.mxu0 0.0
      %1227 = vmatpush1.msra.mxu0 %v557
      %1228 = vmatprep.subr.mxu0 0.0
      %1229 = vmatpush1.msra.mxu0 %v558
      %1230 = vmatprep.subr.mxu0 0.0
      %1231 = vmatpush1.msra.mxu0 %v559
      %1232 = vmatprep.subr.mxu0 0.0
      %1233 = vmatpush1.msra.mxu0 %v560
      %1234 = vmatprep.subr.mxu0 0.0
      %1235 = vmatpush1.msra.mxu0 %v561
      %1236 = vmatprep.subr.mxu0 0.0
      %1237 = vmatpush1.msra.mxu0 %v562
      %1238 = vmatprep.subr.mxu0 0.0
      %1239 = vmatpush1.msra.mxu0 %v563
      %1240 = vmatprep.subr.mxu0 0.0
      %1241 = vmatpush1.msra.mxu0 %v564
      %1242 = vmatprep.subr.mxu0 0.0
      %1243 = vmatpush1.msra.mxu0 %v565
      %1244 = vmatprep.subr.mxu0 0.0
      %1245 = vmatpush1.msra.mxu0 %v566
      %1246 = vmatprep.subr.mxu0 0.0
      %1247 = vmatpush1.msra.mxu0 %v567
      %1248 = vmatprep.subr.mxu0 0.0
      %1249 = vmatpush1.msra.mxu0 %v568
      %1250 = vmatprep.subr.mxu0 0.0
      %1251 = vmatpush1.msra.mxu0 %v569
      %1252 = vmatprep.subr.mxu0 0.0
      %1253 = vmatpush1.msra.mxu0 %v570
      %1254 = vmatprep.subr.mxu0 0.0
      %1255 = vmatpush1.msra.mxu0 %v571
      %1256 = vmatprep.subr.mxu0 0.0
      %1257 = vmatpush1.msra.mxu0 %v572
      %1258 = vmatprep.subr.mxu0 0.0
      %1259 = vmatpush1.msra.mxu0 %v573
      %1260 = vmatprep.subr.mxu0 0.0
      %1261 = vmatpush1.msra.mxu0 %v574
      %1262 = vmatprep.subr.mxu0 0.0
      %1263 = vmatpush1.msra.mxu0 %v575
      %1264 = vmatprep.subr.mxu0 0.0
      %1265 = vmatpush1.msra.mxu0 %v576
      %1266 = vmatprep.subr.mxu0 0.0
      %1267 = vmatpush1.msra.mxu0 %v577
      %1268 = vmatprep.subr.mxu0 0.0
      %1269 = vmatpush1.msra.mxu0 %v578
      %1270 = vmatprep.subr.mxu0 0.0
      %1271 = vmatpush1.msra.mxu0 %v579
      %1272 = vmatprep.subr.mxu0 0.0
      %1273 = vmatpush1.msra.mxu0 %v580
      %1274 = vmatprep.subr.mxu0 0.0
      %1275 = vmatpush1.msra.mxu0 %v581
      %1276 = vmatprep.mubr.f32.mxu0 %v1207
      %1277 = vmatmul.mubr.f32.gmra.mrb[0].mxu0 %v1206
      %v1278 = vpop.f32.mrb[0].mxu0
      %v1279 = vadd.f32 0.0, %v1278
      %v1280 = vpop.f32.mrb[0].mxu0
      %1281 = vmatprep.mubr.f32.mxu0 %v1210
      %1282 = vmatmul.mubr.f32.gmra.mrb[0].mxu0 %v1209
      %v1283 = vpop.f32.mrb[0].mxu0
      %v1284 = vadd.f32 0.0, %v1283
      %v1285 = vpop.f32.mrb[0].mxu0
      %1286 = vdwg.mxu0
      %1287 = vmatprep.subr.mxu0 0.0
      %1288 = vmatpush1.msra.mxu0 %v582
      %1289 = vmatprep.subr.mxu0 0.0
      %1290 = vmatpush1.msra.mxu0 %v583
      %1291 = vmatprep.subr.mxu0 0.0
      %1292 = vmatpush1.msra.mxu0 %v584
      %1293 = vmatprep.subr.mxu0 0.0
      %1294 = vmatpush1.msra.mxu0 %v585
      %1295 = vmatprep.subr.mxu0 0.0
      %1296 = vmatpush1.msra.mxu0 %v586
      %1297 = vmatprep.subr.mxu0 0.0
      %1298 = vmatpush1.msra.mxu0 %v587
      %1299 = vmatprep.subr.mxu0 0.0
      %1300 = vmatpush1.msra.mxu0 %v588
      %1301 = vmatprep.subr.mxu0 0.0
      %1302 = vmatpush1.msra.mxu0 %v589
      %1303 = vmatprep.subr.mxu0 0.0
      %1304 = vmatpush1.msra.mxu0 %v590
      %1305 = vmatprep.subr.mxu0 0.0
      %1306 = vmatpush1.msra.mxu0 %v591
      %1307 = vmatprep.subr.mxu0 0.0
      %1308 = vmatpush1.msra.mxu0 %v592
      %1309 = vmatprep.subr.mxu0 0.0
      %1310 = vmatpush1.msra.mxu0 %v593
      %1311 = vmatprep.subr.mxu0 0.0
      %1312 = vmatpush1.msra.mxu0 %v594
      %1313 = vmatprep.subr.mxu0 0.0
      %1314 = vmatpush1.msra.mxu0 %v595
      %1315 = vmatprep.subr.mxu0 0.0
      %1316 = vmatpush1.msra.mxu0 %v596
      %1317 = vmatprep.subr.mxu0 0.0
      %1318 = vmatpush1.msra.mxu0 %v597
      %1319 = vmatprep.subr.mxu0 0.0
      %1320 = vmatpush1.msra.mxu0 0.0
      %1321 = vmatprep.subr.mxu0 0.0
      %1322 = vmatpush1.msra.mxu0 0.0
      %1323 = vmatprep.subr.mxu0 0.0
      %1324 = vmatpush1.msra.mxu0 0.0
      %1325 = vmatprep.subr.mxu0 0.0
      %1326 = vmatpush1.msra.mxu0 0.0
      %1327 = vmatprep.subr.mxu0 0.0
      %1328 = vmatpush1.msra.mxu0 0.0
      %1329 = vmatprep.subr.mxu0 0.0
      %1330 = vmatpush1.msra.mxu0 0.0
      %1331 = vmatprep.subr.mxu0 0.0
      %1332 = vmatpush1.msra.mxu0 0.0
      %1333 = vmatprep.subr.mxu0 0.0
      %1334 = vmatpush1.msra.mxu0 0.0
      %1335 = vmatprep.subr.mxu0 0.0
      %1336 = vmatpush1.msra.mxu0 0.0
      %1337 = vmatprep.subr.mxu0 0.0
      %1338 = vmatpush1.msra.mxu0 0.0
      %1339 = vmatprep.subr.mxu0 0.0
      %1340 = vmatpush1.msra.mxu0 0.0
      %1341 = vmatprep.subr.mxu0 0.0
      %1342 = vmatpush1.msra.mxu0 0.0
      %1343 = vmatprep.subr.mxu0 0.0
      %1344 = vmatpush1.msra.mxu0 0.0
      %1345 = vmatprep.subr.mxu0 0.0
      %1346 = vmatpush1.msra.mxu0 0.0
      %1347 = vmatprep.subr.mxu0 0.0
      %1348 = vmatpush1.msra.mxu0 0.0
      %1349 = vmatprep.subr.mxu0 0.0
      %1350 = vmatpush1.msra.mxu0 0.0
      %1351 = vmatprep.mubr.f32.mxu0 0.0
      %1352 = vmatmul.mubr.f32.gmra.mrb[0].mxu0 %v1208
      %v1353 = vpop.f32.mrb[0].mxu0
      %v1354 = vadd.f32 %v1279, %v1353
      %v1355 = vpop.f32.mrb[0].mxu0
      %1356 = vmatprep.mubr.f32.mxu0 0.0
      %1357 = vmatmul.mubr.f32.gmra.mrb[0].mxu0 %v1211
      %v1358 = vpop.f32.mrb[0].mxu0
      %v1359 = vadd.f32 %v1284, %v1358
      %v1360 = vpop.f32.mrb[0].mxu0
      %1361 = vdwg.mxu0
      %1363 = vset.pattern.permute.xlu0 0
      %1364 = vperm.xlu0 %1363, %v604
      %v1365 = vpop.permute.xlu0 %1364
      %1368 = vset.pattern.permute.xlu0 0
      %1369 = vperm.xlu0 %1368, %v605
      %v1370 = vpop.permute.xlu0 %1369
      %v1372 = vmul.f32 %v1354, %v1365
      %v1373 = vmul.f32 %v1359, %v1370
      %v1374 = vadd.f32 %v1372, %v1373
      %v1375 = vrot.slane %v1374, 4
      %v1376 = vadd.f32 %v1374, %v1375
      %v1377 = vrot.slane %v1376, 2
      %v1378 = vadd.f32 %v1376, %v1377
      %v1379 = vrot.slane %v1378, 1
      %v1380 = vadd.f32 %v1378, %v1379
      %v1381 = vld [vmem:[%s2] sm:$0xff]
      %v1382 = vld [vmem:[%s2 + $0x8] sm:$0xff]
      %v1383 = vld [vmem:[%s2 + $0x10] sm:$0xff]
      %v1384 = vld [vmem:[%s2 + $0x18] sm:$0xff]
      %v1385 = vld [vmem:[%s2 + $0x20] sm:$0xff]
      %v1386 = vld [vmem:[%s2 + $0x28] sm:$0xff]
      %v1387 = vld [vmem:[%s2 + $0x30] sm:$0xff]
      %v1388 = vld [vmem:[%s2 + $0x38] sm:$0xff]
      %v1389 = vld [vmem:[%s2 + $0x40] sm:$0xff]
      %v1390 = vld [vmem:[%s2 + $0x48] sm:$0xff]
      %v1391 = vld [vmem:[%s2 + $0x50] sm:$0xff]
      %v1392 = vld [vmem:[%s2 + $0x58] sm:$0xff]
      %v1393 = vld [vmem:[%s2 + $0x60] sm:$0xff]
      %v1394 = vld [vmem:[%s2 + $0x68] sm:$0xff]
      %v1395 = vld [vmem:[%s2 + $0x70] sm:$0xff]
      %v1396 = vld [vmem:[%s2 + $0x78] sm:$0xff]
      %v1397 = vld [vmem:[%s2 + $0x80] sm:$0xff]
      %v1398 = vld [vmem:[%s2 + $0x88] sm:$0xff]
      %v1399 = vld [vmem:[%s2 + $0x90] sm:$0xff]
      %v1400 = vld [vmem:[%s2 + $0x98] sm:$0xff]
      %v1401 = vld [vmem:[%s2 + $0xa0] sm:$0xff]
      %v1402 = vld [vmem:[%s2 + $0xa8] sm:$0xff]
      %v1403 = vld [vmem:[%s2 + $0xb0] sm:$0xff]
      %v1404 = vld [vmem:[%s2 + $0xb8] sm:$0xff]
      %v1405 = vld [vmem:[%s2 + $0xc0] sm:$0xff]
      %v1406 = vld [vmem:[%s2 + $0xc8] sm:$0xff]
      %v1407 = vld [vmem:[%s2 + $0xd0] sm:$0xff]
      %v1408 = vld [vmem:[%s2 + $0xd8] sm:$0xff]
      %v1409 = vld [vmem:[%s2 + $0xe0] sm:$0xff]
      %v1410 = vld [vmem:[%s2 + $0xe8] sm:$0xff]
      %v1411 = vld [vmem:[%s2 + $0xf0] sm:$0xff]
      %v1412 = vld [vmem:[%s2 + $0xf8] sm:$0xff]
      %v1413 = vld [vmem:[%s2 + $0x100] sm:$0xff]
      %v1414 = vld [vmem:[%s2 + $0x108] sm:$0xff]
      %v1415 = vld [vmem:[%s2 + $0x110] sm:$0xff]
      %v1416 = vld [vmem:[%s2 + $0x118] sm:$0xff]
      %v1417 = vld [vmem:[%s2 + $0x120] sm:$0xff]
      %v1418 = vld [vmem:[%s2 + $0x128] sm:$0xff]
      %v1419 = vld [vmem:[%s2 + $0x130] sm:$0xff]
      %v1420 = vld [vmem:[%s2 + $0x138] sm:$0xff]
      %v1421 = vld [vmem:[%s2 + $0x140] sm:$0xff]
      %v1422 = vld [vmem:[%s2 + $0x148] sm:$0xff]
      %v1423 = vld [vmem:[%s2 + $0x150] sm:$0xff]
      %v1424 = vld [vmem:[%s2 + $0x158] sm:$0xff]
      %v1425 = vld [vmem:[%s2 + $0x160] sm:$0xff]
      %v1426 = vld [vmem:[%s2 + $0x168] sm:$0xff]
      %v1427 = vld [vmem:[%s2 + $0x170] sm:$0xff]
      %v1428 = vld [vmem:[%s2 + $0x178] sm:$0xff]
      %1429 = vmatprep.subr.mxu0 0.0
      %1430 = vmatpush1.msra.mxu0 %v1381
      %1431 = vmatprep.subr.mxu0 0.0
      %1432 = vmatpush1.msra.mxu0 %v1382
      %1433 = vmatprep.subr.mxu0 0.0
      %1434 = vmatpush1.msra.mxu0 %v1383
      %1435 = vmatprep.subr.mxu0 0.0
      %1436 = vmatpush1.msra.mxu0 %v1384
      %1437 = vmatprep.subr.mxu0 0.0
      %1438 = vmatpush1.msra.mxu0 %v1385
      %1439 = vmatprep.subr.mxu0 0.0
      %1440 = vmatpush1.msra.mxu0 %v1386
      %1441 = vmatprep.subr.mxu0 0.0
      %1442 = vmatpush1.msra.mxu0 %v1387
      %1443 = vmatprep.subr.mxu0 0.0
      %1444 = vmatpush1.msra.mxu0 %v1388
      %1445 = vmatprep.subr.mxu0 0.0
      %1446 = vmatpush1.msra.mxu0 %v1389
      %1447 = vmatprep.subr.mxu0 0.0
      %1448 = vmatpush1.msra.mxu0 %v1390
      %1449 = vmatprep.subr.mxu0 0.0
      %1450 = vmatpush1.msra.mxu0 %v1391
      %1451 = vmatprep.subr.mxu0 0.0
      %1452 = vmatpush1.msra.mxu0 %v1392
      %1453 = vmatprep.subr.mxu0 0.0
      %1454 = vmatpush1.msra.mxu0 %v1393
      %1455 = vmatprep.subr.mxu0 0.0
      %1456 = vmatpush1.msra.mxu0 %v1394
      %1457 = vmatprep.subr.mxu0 0.0
      %1458 = vmatpush1.msra.mxu0 %v1395
      %1459 = vmatprep.subr.mxu0 0.0
      %1460 = vmatpush1.msra.mxu0 %v1396
      %1461 = vmatprep.subr.mxu0 0.0
      %1462 = vmatpush1.msra.mxu0 %v1397
      %1463 = vmatprep.subr.mxu0 0.0
      %1464 = vmatpush1.msra.mxu0 %v1398
      %1465 = vmatprep.subr.mxu0 0.0
      %1466 = vmatpush1.msra.mxu0 %v1399
      %1467 = vmatprep.subr.mxu0 0.0
      %1468 = vmatpush1.msra.mxu0 %v1400
      %1469 = vmatprep.subr.mxu0 0.0
      %1470 = vmatpush1.msra.mxu0 %v1401
      %1471 = vmatprep.subr.mxu0 0.0
      %1472 = vmatpush1.msra.mxu0 %v1402
      %1473 = vmatprep.subr.mxu0 0.0
      %1474 = vmatpush1.msra.mxu0 %v1403
      %1475 = vmatprep.subr.mxu0 0.0
      %1476 = vmatpush1.msra.mxu0 %v1404
      %1477 = vmatprep.subr.mxu0 0.0
      %1478 = vmatpush1.msra.mxu0 %v1405
      %1479 = vmatprep.subr.mxu0 0.0
      %1480 = vmatpush1.msra.mxu0 %v1406
      %1481 = vmatprep.subr.mxu0 0.0
      %1482 = vmatpush1.msra.mxu0 %v1407
      %1483 = vmatprep.subr.mxu0 0.0
      %1484 = vmatpush1.msra.mxu0 %v1408
      %1485 = vmatprep.subr.mxu0 0.0
      %1486 = vmatpush1.msra.mxu0 %v1409
      %1487 = vmatprep.subr.mxu0 0.0
      %1488 = vmatpush1.msra.mxu0 %v1410
      %1489 = vmatprep.subr.mxu0 0.0
      %1490 = vmatpush1.msra.mxu0 %v1411
      %1491 = vmatprep.subr.mxu0 0.0
      %1492 = vmatpush1.msra.mxu0 %v1412
      %1493 = vmatprep.mubr.f32.mxu0 %v735
      %1494 = vmatmul.mubr.f32.gmra.mrb[0].mxu0 %v734
      %v1495 = vpop.f32.mrb[0].mxu0
      %v1496 = vadd.f32 0.0, %v1495
      %v1497 = vpop.f32.mrb[0].mxu0
      %1498 = vdwg.mxu0
      %1499 = vmatprep.subr.mxu0 0.0
      %1500 = vmatpush1.msra.mxu0 %v1413
      %1501 = vmatprep.subr.mxu0 0.0
      %1502 = vmatpush1.msra.mxu0 %v1414
      %1503 = vmatprep.subr.mxu0 0.0
      %1504 = vmatpush1.msra.mxu0 %v1415
      %1505 = vmatprep.subr.mxu0 0.0
      %1506 = vmatpush1.msra.mxu0 %v1416
      %1507 = vmatprep.subr.mxu0 0.0
      %1508 = vmatpush1.msra.mxu0 %v1417
      %1509 = vmatprep.subr.mxu0 0.0
      %1510 = vmatpush1.msra.mxu0 %v1418
      %1511 = vmatprep.subr.mxu0 0.0
      %1512 = vmatpush1.msra.mxu0 %v1419
      %1513 = vmatprep.subr.mxu0 0.0
      %1514 = vmatpush1.msra.mxu0 %v1420
      %1515 = vmatprep.subr.mxu0 0.0
      %1516 = vmatpush1.msra.mxu0 %v1421
      %1517 = vmatprep.subr.mxu0 0.0
      %1518 = vmatpush1.msra.mxu0 %v1422
      %1519 = vmatprep.subr.mxu0 0.0
      %1520 = vmatpush1.msra.mxu0 %v1423
      %1521 = vmatprep.subr.mxu0 0.0
      %1522 = vmatpush1.msra.mxu0 %v1424
      %1523 = vmatprep.subr.mxu0 0.0
      %1524 = vmatpush1.msra.mxu0 %v1425
      %1525 = vmatprep.subr.mxu0 0.0
      %1526 = vmatpush1.msra.mxu0 %v1426
      %1527 = vmatprep.subr.mxu0 0.0
      %1528 = vmatpush1.msra.mxu0 %v1427
      %1529 = vmatprep.subr.mxu0 0.0
      %1530 = vmatpush1.msra.mxu0 %v1428
      %1531 = vmatprep.subr.mxu0 0.0
      %1532 = vmatpush1.msra.mxu0 0.0
      %1533 = vmatprep.subr.mxu0 0.0
      %1534 = vmatpush1.msra.mxu0 0.0
      %1535 = vmatprep.subr.mxu0 0.0
      %1536 = vmatpush1.msra.mxu0 0.0
      %1537 = vmatprep.subr.mxu0 0.0
      %1538 = vmatpush1.msra.mxu0 0.0
      %1539 = vmatprep.subr.mxu0 0.0
      %1540 = vmatpush1.msra.mxu0 0.0
      %1541 = vmatprep.subr.mxu0 0.0
      %1542 = vmatpush1.msra.mxu0 0.0
      %1543 = vmatprep.subr.mxu0 0.0
      %1544 = vmatpush1.msra.mxu0 0.0
      %1545 = vmatprep.subr.mxu0 0.0
      %1546 = vmatpush1.msra.mxu0 0.0
      %1547 = vmatprep.subr.mxu0 0.0
      %1548 = vmatpush1.msra.mxu0 0.0
      %1549 = vmatprep.subr.mxu0 0.0
      %1550 = vmatpush1.msra.mxu0 0.0
      %1551 = vmatprep.subr.mxu0 0.0
      %1552 = vmatpush1.msra.mxu0 0.0
      %1553 = vmatprep.subr.mxu0 0.0
      %1554 = vmatpush1.msra.mxu0 0.0
      %1555 = vmatprep.subr.mxu0 0.0
      %1556 = vmatpush1.msra.mxu0 0.0
      %1557 = vmatprep.subr.mxu0 0.0
      %1558 = vmatpush1.msra.mxu0 0.0
      %1559 = vmatprep.subr.mxu0 0.0
      %1560 = vmatpush1.msra.mxu0 0.0
      %1561 = vmatprep.subr.mxu0 0.0
      %1562 = vmatpush1.msra.mxu0 0.0
      %1563 = vmatprep.mubr.f32.mxu0 0.0
      %1564 = vmatmul.mubr.f32.gmra.mrb[0].mxu0 %v736
      %v1565 = vpop.f32.mrb[0].mxu0
      %v1566 = vadd.f32 %v1496, %v1565
      %v1567 = vpop.f32.mrb[0].mxu0
      %1568 = vdwg.mxu0
      %v1569 = vld [vmem:[%s4] sm:$0x1]
      %v1570 = vld [vmem:[%s5] sm:$0xff]
      %v1571 = vld [vmem:[%s5 + $0x8] sm:$0xff]
      %v1572 = vld [vmem:[%s5 + $0x10] sm:$0xff]
      %v1573 = vld [vmem:[%s5 + $0x18] sm:$0xff]
      %v1574 = vld [vmem:[%s5 + $0x20] sm:$0xff]
      %v1575 = vld [vmem:[%s5 + $0x28] sm:$0xff]
      %v1576 = vld [vmem:[%s5 + $0x30] sm:$0xff]
      %v1577 = vld [vmem:[%s5 + $0x38] sm:$0xff]
      %v1578 = vld [vmem:[%s5 + $0x40] sm:$0xff]
      %v1579 = vld [vmem:[%s5 + $0x48] sm:$0xff]
      %v1580 = vld [vmem:[%s5 + $0x50] sm:$0xff]
      %v1581 = vld [vmem:[%s5 + $0x58] sm:$0xff]
      %v1582 = vld [vmem:[%s5 + $0x60] sm:$0xff]
      %v1583 = vld [vmem:[%s5 + $0x68] sm:$0xff]
      %v1584 = vld [vmem:[%s5 + $0x70] sm:$0xff]
      %v1585 = vld [vmem:[%s5 + $0x78] sm:$0xff]
      %v1586 = vld [vmem:[%s12] sm:$0xff]
      %v1587 = vld [vmem:[%s13] sm:$0xff]
      %v1588 = vld [vmem:[%s14] sm:$0xff]
      %v1589 = vld [vmem:[%s14 + $0x8] sm:$0xff]
      %v1590 = vld [vmem:[%s15] sm:$0xff]
      %v1591 = vld [vmem:[%s15 + $0x8] sm:$0xff]
      %v1592 = vld [vmem:[%s16] sm:$0xff]
      %v1593 = vld [vmem:[%s16 + $0x8] sm:$0xff]
      %1595 = vrot.lane.b32.xlu0 %v1566, 11
      %v1596 = vpop.permute.xlu0 %1595
      %vm1598 = vcmask 89088
      %v1599 = vsel %vm1598, 0.0, %v1596
      %1600 = vrot.lane.b32.xlu0 %v1566, 10
      %v1601 = vpop.permute.xlu0 %1600
      %vm1603 = vcmask 80896
      %v1604 = vsel %vm1603, 0.0, %v1601
      %1605 = vrot.lane.b32.xlu0 %v1566, 9
      %v1606 = vpop.permute.xlu0 %1605
      %vm1608 = vcmask 72704
      %v1609 = vsel %vm1608, 0.0, %v1606
      %1610 = vrot.lane.b32.xlu0 %v1566, 1
      %v1611 = vpop.permute.xlu0 %1610
      %v1613 = vsel %vm654, 0.0, %v1611
      %1614 = vrot.lane.b32.xlu0 %v1566, 127
      %v1615 = vpop.permute.xlu0 %1614
      %v1617 = vsel %vm667, %v1615, 0.0
      %1618 = vrot.lane.b32.xlu0 %v1566, 119
      %v1619 = vpop.permute.xlu0 %1618
      %vm1621 = vcmask 973824
      %v1622 = vsel %vm1621, %v1619, 0.0
      %1623 = vrot.lane.b32.xlu0 %v1566, 118
      %v1624 = vpop.permute.xlu0 %1623
      %vm1626 = vcmask 965632
      %v1627 = vsel %vm1626, %v1624, 0.0
      %1628 = vrot.lane.b32.xlu0 %v1566, 117
      %v1629 = vpop.permute.xlu0 %1628
      %vm1631 = vcmask 957440
      %v1632 = vsel %vm1631, %v1629, 0.0
      %v1633 = vpack.c.bf16 %v1586, %v1586
      %v1634 = vpack.c.bf16 %v1604, %v1599
      %v1635 = vpack.c.bf16 %v1613, %v1609
      %v1636 = vpack.c.bf16 %v1617, %v1566
      %v1637 = vpack.c.bf16 %v1627, %v1622
      %v1638 = vpack.c.bf16 %v1632, %v1632
      %1640 = vset.pattern.permute.xlu0 0
      %1641 = vperm.xlu0 %1640, %v1587
      %v1642 = vpop.permute.xlu0 %1641
      %v1645 = vsel %vm758, %v1633, 0
      %v1648 = vsel %vm762, %v1638, 0
      %1650 = vmatprep.subr.bf16.mxu0 0
      %1651 = vmatpush1.bf16.msra.mxu0 %v1634
      %1652 = vmatprep.subr.bf16.mxu0 0
      %1653 = vmatpush1.bf16.msra.mxu0 %v1635
      %1654 = vmatprep.subr.bf16.mxu0 0
      %1655 = vmatpush1.bf16.msra.mxu0 %v1636
      %1656 = vmatprep.subr.bf16.mxu0 0
      %1657 = vmatpush1.bf16.msra.mxu0 %v1637
      %1658 = vmatprep.subr.bf16.mxu0 0
      %1659 = vmatpush1.bf16.msra.mxu0 %v1648
      %1660 = vmatprep.subr.bf16.mxu0 0
      %1661 = vmatpush1.bf16.msra.mxu0 0
      %1662 = vmatprep.subr.bf16.mxu0 0
      %1663 = vmatpush1.bf16.msra.mxu0 0
      %1664 = vmatprep.subr.bf16.mxu0 0
      %1665 = vmatpush1.bf16.msra.mxu0 0
      %1666 = vmatprep.subr.bf16.mxu0 0
      %1667 = vmatpush1.bf16.msra.mxu0 0
      %1668 = vmatprep.subr.bf16.mxu0 0
      %1669 = vmatpush1.bf16.msra.mxu0 0
      %1670 = vmatprep.subr.bf16.mxu0 0
      %1671 = vmatpush1.bf16.msra.mxu0 0
      %1672 = vmatprep.subr.bf16.mxu0 0
      %1673 = vmatpush1.bf16.msra.mxu0 0
      %1674 = vmatprep.subr.bf16.mxu0 0
      %1675 = vmatpush1.bf16.msra.mxu0 0
      %1676 = vmatprep.subr.bf16.mxu0 0
      %1677 = vmatpush1.bf16.msra.mxu0 0
      %1678 = vmatprep.subr.bf16.mxu0 0
      %1679 = vmatpush1.bf16.msra.mxu0 0
      %1680 = vmatprep.subr.bf16.mxu0 0
      %1681 = vmatpush1.bf16.msra.mxu0 0
      %1682 = vmatprep.mubr.bf16.mxu0 0
      %1683 = vmatmul.mubr.bf16.gmra.mrb[0].mxu0 %v1645
      %v1684 = vpop.f32.mrb[0].mxu0
      %v1685 = vadd.f32 %v1642, %v1684
      %v1686 = vpop.f32.mrb[0].mxu0
      %v1687 = vpop.f32.mrb[0].mxu0
      %v1688 = vpop.f32.mrb[0].mxu0
      %1689 = vdwg.mxu0
      %vm1690 = vcmp.gt.f32.partialorder %v1685, 0.0
      %v1691 = vmul.f32 %v1685, 0.2
      %v1692 = vsel %vm1690, %v1685, %v1691
      %v1694 = vlaneseq
      %v1695 = vshrl.u32 %v1694, 7
      %v1696 = vsub.s32 0, %v1695
      %v1697 = vrot.slane %v1569, %v1696
      %v1699 = vmul.f32 %v1692, %v1697
      %1701 = vrot.lane.b32.xlu0 %v1699, 127
      %v1702 = vpop.permute.xlu0 %1701
      %v1704 = vsel %vm667, %v1702, 0.0
      %1705 = vrot.lane.b32.xlu0 %v1699, 126
      %v1706 = vpop.permute.xlu0 %1705
      %v1708 = vsel %vm902, %v1706, 0.0
      %1709 = vrot.lane.b32.xlu0 %v1699, 125
      %v1710 = vpop.permute.xlu0 %1709
      %v1712 = vsel %vm915, %v1710, 0.0
      %1713 = vrot.lane.b32.xlu0 %v1699, 118
      %v1714 = vpop.permute.xlu0 %1713
      %v1716 = vsel %vm1626, %v1714, 0.0
      %1717 = vrot.lane.b32.xlu0 %v1699, 117
      %v1718 = vpop.permute.xlu0 %1717
      %v1720 = vsel %vm1631, %v1718, 0.0
      %1721 = vrot.lane.b32.xlu0 %v1699, 116
      %v1722 = vpop.permute.xlu0 %1721
      %vm1724 = vcmask 949248
      %v1725 = vsel %vm1724, %v1722, 0.0
      %1726 = vrot.lane.b32.xlu0 %v1699, 115
      %v1727 = vpop.permute.xlu0 %1726
      %vm1729 = vcmask 941056
      %v1730 = vsel %vm1729, %v1727, 0.0
      %1731 = vrot.lane.b32.xlu0 %v1699, 108
      %v1732 = vpop.permute.xlu0 %1731
      %v1734 = vsel %vm952, %v1732, 0.0
      %1735 = vrot.lane.b32.xlu0 %v1699, 107
      %v1736 = vpop.permute.xlu0 %1735
      %v1738 = vsel %vm965, %v1736, 0.0
      %1739 = vrot.lane.b32.xlu0 %v1699, 106
      %v1740 = vpop.permute.xlu0 %1739
      %vm1742 = vcmask 867328
      %v1743 = vsel %vm1742, %v1740, 0.0
      %1744 = vrot.lane.b32.xlu0 %v1699, 105
      %v1745 = vpop.permute.xlu0 %1744
      %vm1747 = vcmask 859136
      %v1748 = vsel %vm1747, %v1745, 0.0
      %1749 = vrot.lane.b32.xlu0 %v1699, 98
      %v1750 = vpop.permute.xlu0 %1749
      %vm1752 = vcmask 801792
      %v1753 = vsel %vm1752, %v1750, 0.0
      %1754 = vrot.lane.b32.xlu0 %v1699, 97
      %v1755 = vpop.permute.xlu0 %1754
      %vm1757 = vcmask 793600
      %v1758 = vsel %vm1757, %v1755, 0.0
      %1759 = vrot.lane.b32.xlu0 %v1699, 96
      %v1760 = vpop.permute.xlu0 %1759
      %vm1762 = vcmask 785408
      %v1763 = vsel %vm1762, %v1760, 0.0
      %1764 = vrot.lane.b32.xlu0 %v1699, 95
      %v1765 = vpop.permute.xlu0 %1764
      %vm1767 = vcmask 777216
      %v1768 = vsel %vm1767, %v1765, 0.0
      %v1769 = vpack.c.bf16 %v1589, %v1588
      %v1770 = vpack.c.bf16 %v1704, %v1699
      %v1771 = vpack.c.bf16 %v1712, %v1708
      %v1772 = vpack.c.bf16 %v1720, %v1716
      %v1773 = vpack.c.bf16 %v1730, %v1725
      %v1774 = vpack.c.bf16 %v1738, %v1734
      %v1775 = vpack.c.bf16 %v1748, %v1743
      %v1776 = vpack.c.bf16 %v1758, %v1753
      %v1777 = vpack.c.bf16 %v1768, %v1763
      %1779 = vset.pattern.permute.xlu0 0
      %1780 = vperm.xlu0 %1779, %v1590
      %v1781 = vpop.permute.xlu0 %1780
      %1784 = vset.pattern.permute.xlu0 0
      %1785 = vperm.xlu0 %1784, %v1591
      %v1786 = vpop.permute.xlu0 %1785
      %1788 = vmatprep.subr.bf16.mxu0 0
      %1789 = vmatpush1.bf16.msra.mxu0 %v1770
      %1790 = vmatprep.subr.bf16.mxu0 0
      %1791 = vmatpush1.bf16.msra.mxu0 %v1771
      %1792 = vmatprep.subr.bf16.mxu0 0
      %1793 = vmatpush1.bf16.msra.mxu0 %v1772
      %1794 = vmatprep.subr.bf16.mxu0 0
      %1795 = vmatpush1.bf16.msra.mxu0 %v1773
      %1796 = vmatprep.subr.bf16.mxu0 0
      %1797 = vmatpush1.bf16.msra.mxu0 %v1774
      %1798 = vmatprep.subr.bf16.mxu0 0
      %1799 = vmatpush1.bf16.msra.mxu0 %v1775
      %1800 = vmatprep.subr.bf16.mxu0 0
      %1801 = vmatpush1.bf16.msra.mxu0 %v1776
      %1802 = vmatprep.subr.bf16.mxu0 0
      %1803 = vmatpush1.bf16.msra.mxu0 %v1777
      %1804 = vmatprep.subr.bf16.mxu0 0
      %1805 = vmatpush1.bf16.msra.mxu0 0
      %1806 = vmatprep.subr.bf16.mxu0 0
      %1807 = vmatpush1.bf16.msra.mxu0 0
      %1808 = vmatprep.subr.bf16.mxu0 0
      %1809 = vmatpush1.bf16.msra.mxu0 0
      %1810 = vmatprep.subr.bf16.mxu0 0
      %1811 = vmatpush1.bf16.msra.mxu0 0
      %1812 = vmatprep.subr.bf16.mxu0 0
      %1813 = vmatpush1.bf16.msra.mxu0 0
      %1814 = vmatprep.subr.bf16.mxu0 0
      %1815 = vmatpush1.bf16.msra.mxu0 0
      %1816 = vmatprep.subr.bf16.mxu0 0
      %1817 = vmatpush1.bf16.msra.mxu0 0
      %1818 = vmatprep.subr.bf16.mxu0 0
      %1819 = vmatpush1.bf16.msra.mxu0 0
      %1820 = vmatprep.mubr.bf16.mxu0 0
      %1821 = vmatmul.mubr.bf16.gmra.mrb[0].mxu0 %v1769
      %v1822 = vpop.f32.mrb[0].mxu0
      %v1823 = vadd.f32 %v1781, %v1822
      %v1824 = vpop.f32.mrb[0].mxu0
      %v1825 = vpop.f32.mrb[0].mxu0
      %v1826 = vadd.f32 %v1786, %v1825
      %v1827 = vpop.f32.mrb[0].mxu0
      %1828 = vdwg.mxu0
      %vm1829 = vcmp.gt.f32.partialorder %v1823, 0.0
      %vm1830 = vcmp.gt.f32.partialorder %v1826, 0.0
      %v1831 = vmul.f32 %v1823, 0.2
      %v1832 = vmul.f32 %v1826, 0.2
      %v1833 = vsel %vm1829, %v1823, %v1831
      %v1834 = vsel %vm1830, %v1826, %v1832
      %1835 = vmatprep.subr.mxu0 0.0
      %1836 = vmatpush1.msra.mxu0 %v1570
      %1837 = vmatprep.subr.mxu0 0.0
      %1838 = vmatpush1.msra.mxu0 %v1571
      %1839 = vmatprep.subr.mxu0 0.0
      %1840 = vmatpush1.msra.mxu0 %v1572
      %1841 = vmatprep.subr.mxu0 0.0
      %1842 = vmatpush1.msra.mxu0 %v1573
      %1843 = vmatprep.subr.mxu0 0.0
      %1844 = vmatpush1.msra.mxu0 %v1574
      %1845 = vmatprep.subr.mxu0 0.0
      %1846 = vmatpush1.msra.mxu0 %v1575
      %1847 = vmatprep.subr.mxu0 0.0
      %1848 = vmatpush1.msra.mxu0 %v1576
      %1849 = vmatprep.subr.mxu0 0.0
      %1850 = vmatpush1.msra.mxu0 %v1577
      %1851 = vmatprep.subr.mxu0 0.0
      %1852 = vmatpush1.msra.mxu0 %v1578
      %1853 = vmatprep.subr.mxu0 0.0
      %1854 = vmatpush1.msra.mxu0 %v1579
      %1855 = vmatprep.subr.mxu0 0.0
      %1856 = vmatpush1.msra.mxu0 %v1580
      %1857 = vmatprep.subr.mxu0 0.0
      %1858 = vmatpush1.msra.mxu0 %v1581
      %1859 = vmatprep.subr.mxu0 0.0
      %1860 = vmatpush1.msra.mxu0 %v1582
      %1861 = vmatprep.subr.mxu0 0.0
      %1862 = vmatpush1.msra.mxu0 %v1583
      %1863 = vmatprep.subr.mxu0 0.0
      %1864 = vmatpush1.msra.mxu0 %v1584
      %1865 = vmatprep.subr.mxu0 0.0
      %1866 = vmatpush1.msra.mxu0 %v1585
      %1867 = vmatprep.subr.mxu0 0.0
      %1868 = vmatpush1.msra.mxu0 0.0
      %1869 = vmatprep.subr.mxu0 0.0
      %1870 = vmatpush1.msra.mxu0 0.0
      %1871 = vmatprep.subr.mxu0 0.0
      %1872 = vmatpush1.msra.mxu0 0.0
      %1873 = vmatprep.subr.mxu0 0.0
      %1874 = vmatpush1.msra.mxu0 0.0
      %1875 = vmatprep.subr.mxu0 0.0
      %1876 = vmatpush1.msra.mxu0 0.0
      %1877 = vmatprep.subr.mxu0 0.0
      %1878 = vmatpush1.msra.mxu0 0.0
      %1879 = vmatprep.subr.mxu0 0.0
      %1880 = vmatpush1.msra.mxu0 0.0
      %1881 = vmatprep.subr.mxu0 0.0
      %1882 = vmatpush1.msra.mxu0 0.0
      %1883 = vmatprep.subr.mxu0 0.0
      %1884 = vmatpush1.msra.mxu0 0.0
      %1885 = vmatprep.subr.mxu0 0.0
      %1886 = vmatpush1.msra.mxu0 0.0
      %1887 = vmatprep.subr.mxu0 0.0
      %1888 = vmatpush1.msra.mxu0 0.0
      %1889 = vmatprep.subr.mxu0 0.0
      %1890 = vmatpush1.msra.mxu0 0.0
      %1891 = vmatprep.subr.mxu0 0.0
      %1892 = vmatpush1.msra.mxu0 0.0
      %1893 = vmatprep.subr.mxu0 0.0
      %1894 = vmatpush1.msra.mxu0 0.0
      %1895 = vmatprep.subr.mxu0 0.0
      %1896 = vmatpush1.msra.mxu0 0.0
      %1897 = vmatprep.subr.mxu0 0.0
      %1898 = vmatpush1.msra.mxu0 0.0
      %1899 = vmatprep.mubr.f32.mxu0 0.0
      %1900 = vmatmul.mubr.f32.gmra.mrb[0].mxu0 %v1833
      %v1901 = vpop.f32.mrb[0].mxu0
      %v1902 = vadd.f32 0.0, %v1901
      %v1903 = vpop.f32.mrb[0].mxu0
      %1904 = vmatprep.mubr.f32.mxu0 0.0
      %1905 = vmatmul.mubr.f32.gmra.mrb[0].mxu0 %v1834
      %v1906 = vpop.f32.mrb[0].mxu0
      %v1907 = vadd.f32 0.0, %v1906
      %v1908 = vpop.f32.mrb[0].mxu0
      %1909 = vdwg.mxu0
      %1911 = vset.pattern.permute.xlu0 0
      %1912 = vperm.xlu0 %1911, %v1592
      %v1913 = vpop.permute.xlu0 %1912
      %1916 = vset.pattern.permute.xlu0 0
      %1917 = vperm.xlu0 %1916, %v1593
      %v1918 = vpop.permute.xlu0 %1917
      %v1920 = vmul.f32 %v1902, %v1913
      %v1921 = vmul.f32 %v1907, %v1918
      %v1922 = vadd.f32 %v1920, %v1921
      %v1923 = vrot.slane %v1922, 4
      %v1924 = vadd.f32 %v1922, %v1923
      %v1925 = vrot.slane %v1924, 2
      %v1926 = vadd.f32 %v1924, %v1925
      %v1927 = vrot.slane %v1926, 1
      %v1928 = vadd.f32 %v1926, %v1927
      %v1929 = vadd.f32 %v1380, %v1928
      %v1930 = vld [vmem:[%s6] sm:$0x1]
      %v1931 = vadd.f32 %v1929, %v1930
      %1932 = vst [vmem:[%s544] sm:$0x1] %v1931
      %p1933 = scmp.lt.s32.totalorder %s28, 1
      %s1934 = scalar_select %p1933, %s28, 1
      %s1935 = scalar_lea.vmem %s17, %s1934
      // Predicated region
      $region89: #{ms_image_dis_council_forward.1} parent=87 // pred_check
        %p1936 = pneg %p408
      $region90: #{ms_image_dis_council_forward.1} parent=87 // pred_check_branch
        %1938 = sbr.rel (%p1936) target = $region92
      $region91: #{ms_image_dis_council_forward.1} parent=87 // pred_region
        _
      $region92: #{ms_image_dis_council_forward.1} parent=87 // pred_fallthru
        _
    $region88: #{ms_image_dis_council_forward.1} parent=5 // pred_fallthru
      _
    %p1939 = scmp.le.s32.totalorder 2, %s23
    // Predicated region
    $region93: #{ms_image_dis_council_forward.1} parent=5 // pred_check
      %p1940 = pneg %p1939
    $region94: #{ms_image_dis_council_forward.1} parent=5 // pred_check_branch
      %1942 = sbr.rel (%p1940) target = $region96
    $region95: #{ms_image_dis_council_forward.1} parent=5 // pred_region
      %s1943 = ssub.s32 %s23, 2
      // Predicated region
      $region97: #{ms_image_dis_council_forward.1} parent=95 // pred_check
        %p1944 = pneg %p414
      $region98: #{ms_image_dis_council_forward.1} parent=95 // pred_check_branch
        %1946 = sbr.rel (%p1944) target = $region100
      $region99: #{ms_image_dis_council_forward.1} parent=95 // pred_region
        %p1947 = scmp.lt.s32.totalorder %s29, 1
        %s1948 = scalar_select %p1947, %s29, 1
        %s1949 = scalar_lea.vmem %s17, %s1948
      $region100: #{ms_image_dis_council_forward.1} parent=95 // pred_fallthru
        _
    $region96: #{ms_image_dis_council_forward.1} parent=5 // pred_fallthru
      _
  $region6: #{ms_image_dis_council_forward.1} parent=0 // loop_footer
    %s27 = sadd.s32 1, %s23
  $region7: #{ms_image_dis_council_forward.1} parent=0 // loop_footer_branch
    %22 = sbr.rel target = $region3
  $region8: #{ms_image_dis_council_forward.1} parent=0 // loop_exit
    _

</llo_original>
